<compile_context>
chip_gen: v5e
topology: v5e:2x2
jax: 0.10.0
libtpu: 0.0.40
codegen_flags: <defaults>
</compile_context>

<pallas_src>
import functools

import jax
import jax.numpy as jnp
from jax import lax
from jax.experimental import pallas as pl
from jax.experimental.pallas import tpu as pltpu


def _round_up(x, m):
    return (x + m - 1) // m * m


def _choose_tile_n(tile_n, n, k):
    """Row-tile size: multiple of 8, <= N rounded up, score tile <= ~8 MiB."""
    tn = min(tile_n, _round_up(n, 8))
    cap = max(256, (8 * 2**20) // max(8 * k, 1))   # 2 live (tn, K) f32 tiles
    tn = min(tn, cap)
    return max(8, (tn // 8) * 8)


def _vq_kernel(x_ref, w_ref, whs_ref, q_ref, sse_ref, *, n_rows):
    """One (tile_n, D) tile of flat latents against the full (K, D) codebook.

    x_ref  : (tile_n, D) latents tile
    w_ref  : (K, D)      full codebook (constant block index; fetched once)
    whs_ref: (1, K)      precomputed 0.5 * ||w_k||^2
    q_ref  : (tile_n, D) quantized output tile
    sse_ref: (1, 8, 128) per-tile partial sum of squared error
    """
    x = x_ref[...]                                 # (tile_n, D) f32
    w = w_ref[...]                                 # (K, D)      f32

    tile_n = x.shape[0]
    k = w.shape[0]

    # Nearest codeword:
    #   argmin_k ||x - w_k||^2  ==  argmax_k ( x . w_k - 0.5 * ||w_k||^2 )
    # (per-row ||x||^2 dropped; 0.5*||w||^2 precomputed in the wrapper;
    #  contracting D-of-x against D-of-w avoids transposing W.)
    xw = lax.dot_general(x, w, (((1,), (1,)), ((), ())),
                         preferred_element_type=jnp.float32)     # (tile_n, K) MXU
    score = xw - whs_ref[...]                                    # (tile_n, K)

    # argmax over K with first-index tie-breaking (matches torch.argmin on dist).
    max_val = jnp.max(score, axis=1, keepdims=True)              # (tile_n, 1)
    col = lax.broadcasted_iota(jnp.int32, (tile_n, k), 1)        # (tile_n, K)
    masked_idx = jnp.where(score >= max_val, col, k)             # ties -> min idx
    inds = jnp.min(masked_idx, axis=1, keepdims=True)            # (tile_n, 1)

    # one-hot @ codebook on the MXU == embedding gather.
    one_hot = (col == inds).astype(jnp.float32)                  # (tile_n, K)
    quantized = jnp.dot(one_hot, w,
                        preferred_element_type=jnp.float32)      # (tile_n, D)

    q_ref[...] = quantized.astype(q_ref.dtype)

    # Per-tile SSE partial, masking rows past the true N (cdiv edge tile).
    # Broadcast over the (1, 8, 128) block; the wrapper reads [i, 0, 0] per
    # tile and sums.
    row = (pl.program_id(0) * tile_n
           + lax.broadcasted_iota(jnp.int32, (tile_n, 1), 0))    # (tile_n, 1)
    diff = jnp.where(row < n_rows, quantized - x, 0.0)           # (tile_n, D)
    partial = jnp.sum(diff * diff)
    sse_ref[...] = partial * jnp.ones((1, 8, 128), dtype=jnp.float32)


@functools.partial(jax.jit, static_argnames=("beta", "tile_n"))
def vector_quantizer_forward(latents_nchw, embedding_w, beta=0.25, tile_n=512):
    """Forward pass of VectorQuantizer.

    latents_nchw: (B, D, H, W) float32
    embedding_w : (K, D) float32 codebook
    Returns (quantized_nchw, vq_loss).  Straight-through value semantics:
      quantized value == codebook lookup, vq_loss == (1 + beta) * mse(q, x).
    """
    B, D, H, W = latents_nchw.shape
    K = embedding_w.shape[0]

    # NCHW -> NHWC -> (N, D).  A D that is a multiple of 128 keeps the q
    # stores lane-dense (full, unmasked vector stores).
    # TODO(synk): pack rows into a lane-dense (N*D/128, 128) slab when D < 128.
    latents_nhwc = jnp.transpose(latents_nchw, (0, 2, 3, 1))
    flat = latents_nhwc.reshape(-1, D).astype(jnp.float32)
    N = flat.shape[0]

    w = embedding_w.astype(jnp.float32)
    # Hoisted codebook constant: 0.5 * ||w_k||^2, shape (1, K).
    w_half_sq = 0.5 * jnp.sum(w * w, axis=1)[None, :]

    tn = _choose_tile_n(tile_n, N, K)
    grid_n = (N + tn - 1) // tn

    # VMEM budget: double-buffered x/q tiles + resident codebook + constants
    # + (tile_n, K) score/one-hot live intermediates, with headroom.
    est = 4 * (4 * tn * D                     # x in + q out, double-buffered
               + 2 * K * D                    # codebook (constant index -> one fetch)
               + 2 * 8 * _round_up(K, 128)    # 0.5*||w||^2
               + 4 * tn * K                   # score / masked idx / one-hot
               + 2 * 8 * 128)                 # per-tile SSE block
    vmem_limit = int(min(max(2 * est, 32 * 2**20), 64 * 2**20))

    kernel = functools.partial(_vq_kernel, n_rows=N)

    quantized_flat, sse_partial = pl.pallas_call(
        kernel,
        out_shape=(
            jax.ShapeDtypeStruct((N, D), jnp.float32),
            jax.ShapeDtypeStruct((grid_n, 8, 128), jnp.float32),
        ),
        grid_spec=pltpu.PrefetchScalarGridSpec(
            num_scalar_prefetch=0,
            grid=(grid_n,),
            in_specs=[
                pl.BlockSpec((tn, D), lambda i: (i, 0)),
                pl.BlockSpec((K, D), lambda i: (0, 0)),
                pl.BlockSpec((1, K), lambda i: (0, 0)),
            ],
            out_specs=[
                pl.BlockSpec((tn, D), lambda i: (i, 0)),
                pl.BlockSpec((1, 8, 128), lambda i: (i, 0, 0)),
            ],
        ),
        compiler_params=pltpu.CompilerParams(
            # No cross-iteration carry -> the row axis is truly parallel
            # (lets v7x shard the grid across both TensorCores).
            dimension_semantics=("parallel",),
            vmem_limit_bytes=vmem_limit,
        ),
    )(flat, w, w_half_sq)

    # Each tile wrote its partial SSE broadcast over its (1, 8, 128) block.
    sse = jnp.sum(sse_partial[:, 0, 0])
    mse = sse / jnp.float32(N * D)
    # commitment_loss == embedding_loss numerically in the forward pass.
    vq_loss = mse * beta + mse

    quantized_nhwc = quantized_flat.reshape(B, H, W, D)
    # Straight-through: value of latents + (q - latents).detach() == q.
    quantized_nchw = jnp.transpose(quantized_nhwc, (0, 3, 1, 2))
    return quantized_nchw, vq_loss


def _reference_forward(latents_nchw, embedding_w, beta=0.25):
    """Pure-JAX reference mirroring the PyTorch forward (torch dist formula)."""
    B, D, H, W = latents_nchw.shape
    lat = jnp.transpose(latents_nchw, (0, 2, 3, 1))
    flat = lat.reshape(-1, D)
    dist = (
        jnp.sum(flat ** 2, axis=1, keepdims=True)
        + jnp.sum(embedding_w ** 2, axis=1)
        - 2.0 * flat @ embedding_w.T
    )
    inds = jnp.argmin(dist, axis=1)
    q = embedding_w[inds].reshape(B, H, W, D)
    mse = jnp.mean((q - lat) ** 2)
    vq_loss = mse * beta + mse
    return jnp.transpose(q, (0, 3, 1, 2)), vq_loss


def _check(latents, embedding_w, q, loss, beta):
    """Robust per-row 'nearest codeword' check (tolerates fp near-ties)."""
    B, D, H, W = latents.shape
    q_ref, loss_ref = _reference_forward(latents, embedding_w, beta=beta)
    assert q.shape == (B, D, H, W)
    x_flat = jnp.transpose(latents, (0, 2, 3, 1)).reshape(-1, D)
    q_flat = jnp.transpose(q, (0, 2, 3, 1)).reshape(-1, D)
    qr_flat = jnp.transpose(q_ref, (0, 2, 3, 1)).reshape(-1, D)
    same_row = jnp.all(jnp.abs(q_flat - qr_flat) <= 1e-5, axis=1)
    d_kernel = jnp.sum((q_flat - x_flat) ** 2, axis=1)
    d_ref = jnp.sum((qr_flat - x_flat) ** 2, axis=1)
    near_tie = jnp.abs(d_kernel - d_ref) <= 1e-4 * (1.0 + d_ref)
    assert bool(jnp.all(same_row | near_tie))
    assert jnp.allclose(loss, loss_ref, atol=1e-5, rtol=1e-4)


if __name__ == "__main__":
    key = jax.random.PRNGKey(0)
    beta = 0.25

    # Config 1: lane-dense D=128, K=128 codebook, N = 2*12*12 = 288 rows.
    B, D, H, W = 2, 128, 12, 12
    K = 128
    k_x, k_w, k_rest = jax.random.split(key, 3)
    latents = jax.random.normal(k_x, (B, D, H, W), dtype=jnp.float32)
    # nn.Embedding weight init in the module: uniform(-1/K, 1/K).
    embedding_w = jax.random.uniform(
        k_w, (K, D), minval=-1.0 / K, maxval=1.0 / K, dtype=jnp.float32
    )

    q, loss = vector_quantizer_forward(latents, embedding_w, beta=beta)
    jax.block_until_ready((q, loss))
    _check(latents, embedding_w, q, loss, beta)

    # Same inputs, tiny tile: exercises the cdiv edge tile + row masking path.
    q2, loss2 = vector_quantizer_forward(latents, embedding_w, beta=beta, tile_n=64)
    jax.block_until_ready((q2, loss2))
    _check(latents, embedding_w, q2, loss2, beta)

    # Config 2: D=64 (< lane width) and a larger K=512 codebook.
    B2, D2, H2, W2 = 2, 64, 10, 10
    K2 = 512
    k_x2, k_w2 = jax.random.split(k_rest)
    latents2 = jax.random.normal(k_x2, (B2, D2, H2, W2), dtype=jnp.float32)
    embedding_w2 = jax.random.uniform(
        k_w2, (K2, D2), minval=-1.0 / K2, maxval=1.0 / K2, dtype=jnp.float32
    )
    q3, loss3 = vector_quantizer_forward(latents2, embedding_w2, beta=beta)
    jax.block_until_ready((q3, loss3))
    _check(latents2, embedding_w2, q3, loss3, beta)

    print("KERNEL_OK")
</pallas_src>

<mosaic_0001>
module attributes {stable_mosaic.version = 11 : i64} {
  func.func @_vq_kernel(%arg0: i32, %arg1: memref<288x128xf32, #tpu.memory_space<vmem>>, %arg2: memref<128x128xf32, #tpu.memory_space<vmem>>, %arg3: memref<1x128xf32, #tpu.memory_space<vmem>>, %arg4: memref<288x128xf32, #tpu.memory_space<vmem>>, %arg5: memref<1x8x128xf32, #tpu.memory_space<vmem>>) attributes {dimension_semantics = [#tpu.dimension_semantics<parallel>], iteration_bounds = array<i64: 1>, scalar_prefetch = 0 : i64, scratch_operands = 0 : i64, tpu.core_type = #tpu.core_type<tc>, window_params = [{transform_indices = @transform_0, window_bounds = array<i64: 288, 128>}, {pipeline_mode = #tpu.pipeline_mode<synchronous>, transform_indices = @transform_1, window_bounds = array<i64: 128, 128>}, {pipeline_mode = #tpu.pipeline_mode<synchronous>, transform_indices = @transform_2, window_bounds = array<i64: 1, 128>}, {transform_indices = @transform_3, window_bounds = array<i64: 288, 128>}, {transform_indices = @transform_4, window_bounds = array<i64: 1, 8, 128>}]} {
    %c0 = arith.constant 0 : index
    %c0_0 = arith.constant 0 : index
    %0 = vector.load %arg1[%c0, %c0_0] : memref<288x128xf32, #tpu.memory_space<vmem>>, vector<288x128xf32>
    %c0_1 = arith.constant 0 : index
    %c0_2 = arith.constant 0 : index
    %1 = vector.load %arg2[%c0_1, %c0_2] : memref<128x128xf32, #tpu.memory_space<vmem>>, vector<128x128xf32>
    %cst = arith.constant dense<0.000000e+00> : vector<288x128xf32>
    %2 = tpu.matmul %0, %1, %cst {dimension_numbers = #tpu.dot_dimension_numbers<[1], [1], [0], [0], [0, 0, 1, 0], [], []>} : vector<288x128xf32>, vector<128x128xf32>, vector<288x128xf32> -> vector<288x128xf32>
    %c0_3 = arith.constant 0 : index
    %c0_4 = arith.constant 0 : index
    %3 = vector.load %arg3[%c0_3, %c0_4] : memref<1x128xf32, #tpu.memory_space<vmem>>, vector<1x128xf32>
    %4 = vector.broadcast %3 : vector<1x128xf32> to vector<288x128xf32>
    %5 = arith.subf %2, %4 : vector<288x128xf32>
    %cst_5 = arith.constant dense<0xFF800000> : vector<288xf32>
    %6 = vector.multi_reduction <maximumf>, %5, %cst_5 [1] : vector<288x128xf32> to vector<288xf32>
    %7 = vector.shape_cast %6 : vector<288xf32> to vector<288x1xf32>
    %8 = tpu.iota {dimensions = array<i32: 1>} : vector<288x128xi32>
    %9 = vector.broadcast %7 : vector<288x1xf32> to vector<288x128xf32>
    %10 = arith.cmpf oge, %5, %9 : vector<288x128xf32>
    %c128_i32 = arith.constant 128 : i32
    %11 = vector.broadcast %c128_i32 : i32 to vector<288x128xi32>
    %12 = arith.select %10, %8, %11 : vector<288x128xi1>, vector<288x128xi32>
    %cst_6 = arith.constant dense<2147483647> : vector<288xi32>
    %13 = vector.multi_reduction <minsi>, %12, %cst_6 [1] : vector<288x128xi32> to vector<288xi32>
    %14 = vector.shape_cast %13 : vector<288xi32> to vector<288x1xi32>
    %15 = vector.broadcast %14 : vector<288x1xi32> to vector<288x128xi32>
    %16 = arith.cmpi eq, %8, %15 : vector<288x128xi32>
    %17 = arith.extui %16 : vector<288x128xi1> to vector<288x128xi32>
    %18 = arith.sitofp %17 : vector<288x128xi32> to vector<288x128xf32>
    %cst_7 = arith.constant dense<0.000000e+00> : vector<288x128xf32>
    %19 = tpu.matmul %18, %1, %cst_7 {dimension_numbers = #tpu.dot_dimension_numbers<[1], [0], [0], [1], [0, 0, 1, 1], [], []>} : vector<288x128xf32>, vector<128x128xf32>, vector<288x128xf32> -> vector<288x128xf32>
    %c0_8 = arith.constant 0 : index
    %c0_9 = arith.constant 0 : index
    %20 = vector.load %arg4[%c0_8, %c0_9] : memref<288x128xf32, #tpu.memory_space<vmem>>, vector<288x128xf32>
    tpu.vector_store %arg4[%c0_8, %c0_9], %19 {strides = array<i32>} : memref<288x128xf32, #tpu.memory_space<vmem>>, vector<288x128xf32>,
    %c288_i32 = arith.constant 288 : i32
    %21 = arith.muli %arg0, %c288_i32 : i32
    %22 = tpu.iota {dimensions = array<i32: 0>} : vector<288x1xi32>
    %23 = vector.broadcast %21 : i32 to vector<288x1xi32>
    %24 = arith.addi %23, %22 : vector<288x1xi32>
    %c288_i32_10 = arith.constant 288 : i32
    %25 = vector.broadcast %c288_i32_10 : i32 to vector<288x1xi32>
    %26 = arith.cmpi slt, %24, %25 : vector<288x1xi32>
    %27 = arith.subf %19, %0 : vector<288x128xf32>
    %cst_11 = arith.constant 0.000000e+00 : f32
    %28 = vector.shape_cast %26 : vector<288x1xi1> to vector<288x1xi1>
    %29 = vector.broadcast %28 : vector<288x1xi1> to vector<288x128xi1>
    %30 = vector.broadcast %cst_11 : f32 to vector<288x128xf32>
    %31 = arith.select %29, %27, %30 : vector<288x128xi1>, vector<288x128xf32>
    %32 = arith.mulf %31, %31 : vector<288x128xf32>
    %33 = vector.shape_cast %32 : vector<288x128xf32> to vector<1x288x128xf32>
    %cst_12 = arith.constant dense<0.000000e+00> : vector<1xf32>
    %34 = vector.multi_reduction <add>, %33, %cst_12 [1, 2] : vector<1x288x128xf32> to vector<1xf32>
    %35 = vector.shape_cast %34 : vector<1xf32> to vector<1x1x1xf32>
    %36 = vector.extract %35[0, 0, 0] : f32 from vector<1x1x1xf32>
    %cst_13 = arith.constant 1.000000e+00 : f32
    %37 = vector.broadcast %cst_13 : f32 to vector<1x8x128xf32>
    %38 = vector.broadcast %36 : f32 to vector<1x8x128xf32>
    %39 = arith.mulf %38, %37 : vector<1x8x128xf32>
    %c0_14 = arith.constant 0 : index
    %c0_15 = arith.constant 0 : index
    %c0_16 = arith.constant 0 : index
    %40 = vector.load %arg5[%c0_14, %c0_15, %c0_16] : memref<1x8x128xf32, #tpu.memory_space<vmem>>, vector<1x8x128xf32>
    tpu.vector_store %arg5[%c0_14, %c0_15, %c0_16], %39 {strides = array<i32>} : memref<1x8x128xf32, #tpu.memory_space<vmem>>, vector<1x8x128xf32>,
    return
  }
  func.func @transform_0(%arg0: i32) -> (i32, i32) {
    %c0_i32 = arith.constant 0 : i32
    %c0_i32_0 = arith.constant 0 : i32
    return %arg0, %c0_i32 : i32, i32
  }
  func.func @transform_1(%arg0: i32) -> (i32, i32) {
    %c0_i32 = arith.constant 0 : i32
    %c0_i32_0 = arith.constant 0 : i32
    %c0_i32_1 = arith.constant 0 : i32
    return %c0_i32, %c0_i32_0 : i32, i32
  }
  func.func @transform_2(%arg0: i32) -> (i32, i32) {
    %c0_i32 = arith.constant 0 : i32
    %c0_i32_0 = arith.constant 0 : i32
    %c0_i32_1 = arith.constant 0 : i32
    return %c0_i32, %c0_i32_0 : i32, i32
  }
  func.func @transform_3(%arg0: i32) -> (i32, i32) {
    %c0_i32 = arith.constant 0 : i32
    %c0_i32_0 = arith.constant 0 : i32
    return %arg0, %c0_i32 : i32, i32
  }
  func.func @transform_4(%arg0: i32) -> (i32, i32, i32) {
    %c0_i32 = arith.constant 0 : i32
    %c0_i32_0 = arith.constant 0 : i32
    %c0_i32_1 = arith.constant 0 : i32
    return %arg0, %c0_i32, %c0_i32_0 : i32, i32, i32
  }
}

</mosaic_0001>

<llo_original>
// kernel: vector_quantizer_forward.1
$region0: #{vector_quantizer_forward.1}
  #allocation0 [shape = 'u32[]', space=smem, size = 0x4, offset = 0x4, fixed_abs, tag = 'smem constant byte address 0x4 - core index']
  #allocation1 [shape = 'u32[72,128]{1,0:T(1,128)}', space=vmem, size = 0x9000, scoped, tag = 'internal scratch']
  %s0 = inlined_call_operand.vmem [shape: f32[288,128], index: 0, kind: input, shape index: {}]
  %s1 = inlined_call_operand.vmem [shape: f32[128,128], index: 1, kind: input, shape index: {}]
  %s2 = inlined_call_operand.vmem [shape: f32[1,128], index: 2, kind: input, shape index: {}]
  %s3 = inlined_call_operand.vmem [shape: f32[288,128], index: 3, kind: output, shape index: {0}]
  %s4 = inlined_call_operand.vmem [shape: f32[1,8,128], index: 4, kind: output, shape index: {1}]
  %5 = xla_tuple %s3, %s4
  %s6 = sld [smem:[#allocation0]]
  $region30: #{vector_quantizer_forward.1} parent=0
    _
  %s8 = ssub.s32 1, %s6
  %s9 = scalar_select 0, %s8, %s6
  // Predicated region
  $region2: #{vector_quantizer_forward.1} parent=0 // pred_check
    _
  $region3: #{vector_quantizer_forward.1} parent=0 // pred_check_branch
    %11 = sbr.rel (0) target = $region5
  $region4: #{vector_quantizer_forward.1} parent=0 // pred_region
    _
  $region5: #{vector_quantizer_forward.1} parent=0 // pred_fallthru
    _
  // Predicated region
  $region6: #{vector_quantizer_forward.1} parent=0 // pred_check
    _
  $region7: #{vector_quantizer_forward.1} parent=0 // pred_check_branch
    %13 = sbr.rel (0) target = $region9
  $region8: #{vector_quantizer_forward.1} parent=0 // pred_region
    _
  $region9: #{vector_quantizer_forward.1} parent=0 // pred_fallthru
    _
  // Predicated region
  $region10: #{vector_quantizer_forward.1} parent=0 // pred_check
    _
  $region11: #{vector_quantizer_forward.1} parent=0 // pred_check_branch
    %15 = sbr.rel (0) target = $region13
  $region12: #{vector_quantizer_forward.1} parent=0 // pred_region
    _
  $region13: #{vector_quantizer_forward.1} parent=0 // pred_fallthru
    _
  %v16 = vld [vmem:[%s0] sm:$0xff]
  %v17 = vld [vmem:[%s0 + $0x8] sm:$0xff]
  %v18 = vld [vmem:[%s0 + $0x10] sm:$0xff]
  %v19 = vld [vmem:[%s0 + $0x18] sm:$0xff]
  %v20 = vld [vmem:[%s0 + $0x20] sm:$0xff]
  %v21 = vld [vmem:[%s0 + $0x28] sm:$0xff]
  %v22 = vld [vmem:[%s0 + $0x30] sm:$0xff]
  %v23 = vld [vmem:[%s0 + $0x38] sm:$0xff]
  %v24 = vld [vmem:[%s0 + $0x40] sm:$0xff]
  %v25 = vld [vmem:[%s0 + $0x48] sm:$0xff]
  %v26 = vld [vmem:[%s0 + $0x50] sm:$0xff]
  %v27 = vld [vmem:[%s0 + $0x58] sm:$0xff]
  %v28 = vld [vmem:[%s0 + $0x60] sm:$0xff]
  %v29 = vld [vmem:[%s0 + $0x68] sm:$0xff]
  %v30 = vld [vmem:[%s0 + $0x70] sm:$0xff]
  %v31 = vld [vmem:[%s0 + $0x78] sm:$0xff]
  %v32 = vld [vmem:[%s0 + $0x80] sm:$0xff]
  %v33 = vld [vmem:[%s0 + $0x88] sm:$0xff]
  %v34 = vld [vmem:[%s0 + $0x90] sm:$0xff]
  %v35 = vld [vmem:[%s0 + $0x98] sm:$0xff]
  %v36 = vld [vmem:[%s0 + $0xa0] sm:$0xff]
  %v37 = vld [vmem:[%s0 + $0xa8] sm:$0xff]
  %v38 = vld [vmem:[%s0 + $0xb0] sm:$0xff]
  %v39 = vld [vmem:[%s0 + $0xb8] sm:$0xff]
  %v40 = vld [vmem:[%s0 + $0xc0] sm:$0xff]
  %v41 = vld [vmem:[%s0 + $0xc8] sm:$0xff]
  %v42 = vld [vmem:[%s0 + $0xd0] sm:$0xff]
  %v43 = vld [vmem:[%s0 + $0xd8] sm:$0xff]
  %v44 = vld [vmem:[%s0 + $0xe0] sm:$0xff]
  %v45 = vld [vmem:[%s0 + $0xe8] sm:$0xff]
  %v46 = vld [vmem:[%s0 + $0xf0] sm:$0xff]
  %v47 = vld [vmem:[%s0 + $0xf8] sm:$0xff]
  %v48 = vld [vmem:[%s0 + $0x100] sm:$0xff]
  %v49 = vld [vmem:[%s0 + $0x108] sm:$0xff]
  %v50 = vld [vmem:[%s0 + $0x110] sm:$0xff]
  %v51 = vld [vmem:[%s0 + $0x118] sm:$0xff]
  %v52 = vld [vmem:[%s1] sm:$0xff]
  %v53 = vld [vmem:[%s1 + $0x8] sm:$0xff]
  %v54 = vld [vmem:[%s1 + $0x10] sm:$0xff]
  %v55 = vld [vmem:[%s1 + $0x18] sm:$0xff]
  %v56 = vld [vmem:[%s1 + $0x20] sm:$0xff]
  %v57 = vld [vmem:[%s1 + $0x28] sm:$0xff]
  %v58 = vld [vmem:[%s1 + $0x30] sm:$0xff]
  %v59 = vld [vmem:[%s1 + $0x38] sm:$0xff]
  %v60 = vld [vmem:[%s1 + $0x40] sm:$0xff]
  %v61 = vld [vmem:[%s1 + $0x48] sm:$0xff]
  %v62 = vld [vmem:[%s1 + $0x50] sm:$0xff]
  %v63 = vld [vmem:[%s1 + $0x58] sm:$0xff]
  %v64 = vld [vmem:[%s1 + $0x60] sm:$0xff]
  %v65 = vld [vmem:[%s1 + $0x68] sm:$0xff]
  %v66 = vld [vmem:[%s1 + $0x70] sm:$0xff]
  %v67 = vld [vmem:[%s1 + $0x78] sm:$0xff]
  %68 = vmatpush.xpose.msra.mxu0 %v67
  %69 = vmatpush.xpose.msra.mxu0 %v66
  %70 = vmatpush.xpose.msra.mxu0 %v65
  %71 = vmatpush.xpose.msra.mxu0 %v64
  %72 = vmatpush.xpose.msra.mxu0 %v63
  %73 = vmatpush.xpose.msra.mxu0 %v62
  %74 = vmatpush.xpose.msra.mxu0 %v61
  %75 = vmatpush.xpose.msra.mxu0 %v60
  %76 = vmatpush.xpose.msra.mxu0 %v59
  %77 = vmatpush.xpose.msra.mxu0 %v58
  %78 = vmatpush.xpose.msra.mxu0 %v57
  %79 = vmatpush.xpose.msra.mxu0 %v56
  %80 = vmatpush.xpose.msra.mxu0 %v55
  %81 = vmatpush.xpose.msra.mxu0 %v54
  %82 = vmatpush.xpose.msra.mxu0 %v53
  %83 = vmatpush.xpose.msra.mxu0 %v52
  %84 = vmatmul.f32.gmra.mxu0 %v16
  %v85 = vpop.f32.mrf.mxu0
  %v86 = vadd.f32 0.0, %v85
  %87 = vmatmul.f32.gmra.mxu0 %v17
  %v88 = vpop.f32.mrf.mxu0
  %v89 = vadd.f32 0.0, %v88
  %90 = vmatmul.f32.gmra.mxu0 %v18
  %v91 = vpop.f32.mrf.mxu0
  %v92 = vadd.f32 0.0, %v91
  %93 = vmatmul.f32.gmra.mxu0 %v19
  %v94 = vpop.f32.mrf.mxu0
  %v95 = vadd.f32 0.0, %v94
  %96 = vmatmul.f32.gmra.mxu0 %v20
  %v97 = vpop.f32.mrf.mxu0
  %v98 = vadd.f32 0.0, %v97
  %99 = vmatmul.f32.gmra.mxu0 %v21
  %v100 = vpop.f32.mrf.mxu0
  %v101 = vadd.f32 0.0, %v100
  %102 = vmatmul.f32.gmra.mxu0 %v22
  %v103 = vpop.f32.mrf.mxu0
  %v104 = vadd.f32 0.0, %v103
  %105 = vmatmul.f32.gmra.mxu0 %v23
  %v106 = vpop.f32.mrf.mxu0
  %v107 = vadd.f32 0.0, %v106
  %108 = vmatmul.f32.gmra.mxu0 %v24
  %v109 = vpop.f32.mrf.mxu0
  %v110 = vadd.f32 0.0, %v109
  %111 = vmatmul.f32.gmra.mxu0 %v25
  %v112 = vpop.f32.mrf.mxu0
  %v113 = vadd.f32 0.0, %v112
  %114 = vmatmul.f32.gmra.mxu0 %v26
  %v115 = vpop.f32.mrf.mxu0
  %v116 = vadd.f32 0.0, %v115
  %117 = vmatmul.f32.gmra.mxu0 %v27
  %v118 = vpop.f32.mrf.mxu0
  %v119 = vadd.f32 0.0, %v118
  %120 = vmatmul.f32.gmra.mxu0 %v28
  %v121 = vpop.f32.mrf.mxu0
  %v122 = vadd.f32 0.0, %v121
  %123 = vmatmul.f32.gmra.mxu0 %v29
  %v124 = vpop.f32.mrf.mxu0
  %v125 = vadd.f32 0.0, %v124
  %126 = vmatmul.f32.gmra.mxu0 %v30
  %v127 = vpop.f32.mrf.mxu0
  %v128 = vadd.f32 0.0, %v127
  %129 = vmatmul.f32.gmra.mxu0 %v31
  %v130 = vpop.f32.mrf.mxu0
  %v131 = vadd.f32 0.0, %v130
  %132 = vmatmul.f32.gmra.mxu0 %v32
  %v133 = vpop.f32.mrf.mxu0
  %v134 = vadd.f32 0.0, %v133
  %135 = vmatmul.f32.gmra.mxu0 %v33
  %v136 = vpop.f32.mrf.mxu0
  %v137 = vadd.f32 0.0, %v136
  %138 = vmatmul.f32.gmra.mxu0 %v34
  %v139 = vpop.f32.mrf.mxu0
  %v140 = vadd.f32 0.0, %v139
  %141 = vmatmul.f32.gmra.mxu0 %v35
  %v142 = vpop.f32.mrf.mxu0
  %v143 = vadd.f32 0.0, %v142
  %144 = vmatmul.f32.gmra.mxu0 %v36
  %v145 = vpop.f32.mrf.mxu0
  %v146 = vadd.f32 0.0, %v145
  %147 = vmatmul.f32.gmra.mxu0 %v37
  %v148 = vpop.f32.mrf.mxu0
  %v149 = vadd.f32 0.0, %v148
  %150 = vmatmul.f32.gmra.mxu0 %v38
  %v151 = vpop.f32.mrf.mxu0
  %v152 = vadd.f32 0.0, %v151
  %153 = vmatmul.f32.gmra.mxu0 %v39
  %v154 = vpop.f32.mrf.mxu0
  %v155 = vadd.f32 0.0, %v154
  %156 = vmatmul.f32.gmra.mxu0 %v40
  %v157 = vpop.f32.mrf.mxu0
  %v158 = vadd.f32 0.0, %v157
  %159 = vmatmul.f32.gmra.mxu0 %v41
  %v160 = vpop.f32.mrf.mxu0
  %v161 = vadd.f32 0.0, %v160
  %162 = vmatmul.f32.gmra.mxu0 %v42
  %v163 = vpop.f32.mrf.mxu0
  %v164 = vadd.f32 0.0, %v163
  %165 = vmatmul.f32.gmra.mxu0 %v43
  %v166 = vpop.f32.mrf.mxu0
  %v167 = vadd.f32 0.0, %v166
  %168 = vmatmul.f32.gmra.mxu0 %v44
  %v169 = vpop.f32.mrf.mxu0
  %v170 = vadd.f32 0.0, %v169
  %171 = vmatmul.f32.gmra.mxu0 %v45
  %v172 = vpop.f32.mrf.mxu0
  %v173 = vadd.f32 0.0, %v172
  %174 = vmatmul.f32.gmra.mxu0 %v46
  %v175 = vpop.f32.mrf.mxu0
  %v176 = vadd.f32 0.0, %v175
  %177 = vmatmul.f32.gmra.mxu0 %v47
  %v178 = vpop.f32.mrf.mxu0
  %v179 = vadd.f32 0.0, %v178
  %180 = vmatmul.f32.gmra.mxu0 %v48
  %v181 = vpop.f32.mrf.mxu0
  %v182 = vadd.f32 0.0, %v181
  %183 = vmatmul.f32.gmra.mxu0 %v49
  %v184 = vpop.f32.mrf.mxu0
  %v185 = vadd.f32 0.0, %v184
  %186 = vmatmul.f32.gmra.mxu0 %v50
  %v187 = vpop.f32.mrf.mxu0
  %v188 = vadd.f32 0.0, %v187
  %189 = vmatmul.f32.gmra.mxu0 %v51
  %v190 = vpop.f32.mrf.mxu0
  %v191 = vadd.f32 0.0, %v190
  %192 = vdwg.mxu0
  %v193 = vld [vmem:[%s2] sm:$0x1]
  %v195 = vperm.slane %v193, 0
  %v197 = vsub.f32 %v86, %v195
  %v198 = vsub.f32 %v89, %v195
  %v199 = vsub.f32 %v92, %v195
  %v200 = vsub.f32 %v95, %v195
  %v201 = vsub.f32 %v98, %v195
  %v202 = vsub.f32 %v101, %v195
  %v203 = vsub.f32 %v104, %v195
  %v204 = vsub.f32 %v107, %v195
  %v205 = vsub.f32 %v110, %v195
  %v206 = vsub.f32 %v113, %v195
  %v207 = vsub.f32 %v116, %v195
  %v208 = vsub.f32 %v119, %v195
  %v209 = vsub.f32 %v122, %v195
  %v210 = vsub.f32 %v125, %v195
  %v211 = vsub.f32 %v128, %v195
  %v212 = vsub.f32 %v131, %v195
  %v213 = vsub.f32 %v134, %v195
  %v214 = vsub.f32 %v137, %v195
  %v215 = vsub.f32 %v140, %v195
  %v216 = vsub.f32 %v143, %v195
  %v217 = vsub.f32 %v146, %v195
  %v218 = vsub.f32 %v149, %v195
  %v219 = vsub.f32 %v152, %v195
  %v220 = vsub.f32 %v155, %v195
  %v221 = vsub.f32 %v158, %v195
  %v222 = vsub.f32 %v161, %v195
  %v223 = vsub.f32 %v164, %v195
  %v224 = vsub.f32 %v167, %v195
  %v225 = vsub.f32 %v170, %v195
  %v226 = vsub.f32 %v173, %v195
  %v227 = vsub.f32 %v176, %v195
  %v228 = vsub.f32 %v179, %v195
  %v229 = vsub.f32 %v182, %v195
  %v230 = vsub.f32 %v185, %v195
  %v231 = vsub.f32 %v188, %v195
  %v232 = vsub.f32 %v191, %v195
  %233 = vmax.xlane.f32.xlu0 %v197
  %v234 = vpop.xlane.xlu0 %233
  %235 = vmax.xlane.f32.xlu0 %v198
  %v236 = vpop.xlane.xlu0 %235
  %237 = vmax.xlane.f32.xlu0 %v199
  %v238 = vpop.xlane.xlu0 %237
  %239 = vmax.xlane.f32.xlu0 %v200
  %v240 = vpop.xlane.xlu0 %239
  %241 = vmax.xlane.f32.xlu0 %v201
  %v242 = vpop.xlane.xlu0 %241
  %243 = vmax.xlane.f32.xlu0 %v202
  %v244 = vpop.xlane.xlu0 %243
  %245 = vmax.xlane.f32.xlu0 %v203
  %v246 = vpop.xlane.xlu0 %245
  %247 = vmax.xlane.f32.xlu0 %v204
  %v248 = vpop.xlane.xlu0 %247
  %249 = vmax.xlane.f32.xlu0 %v205
  %v250 = vpop.xlane.xlu0 %249
  %251 = vmax.xlane.f32.xlu0 %v206
  %v252 = vpop.xlane.xlu0 %251
  %253 = vmax.xlane.f32.xlu0 %v207
  %v254 = vpop.xlane.xlu0 %253
  %255 = vmax.xlane.f32.xlu0 %v208
  %v256 = vpop.xlane.xlu0 %255
  %257 = vmax.xlane.f32.xlu0 %v209
  %v258 = vpop.xlane.xlu0 %257
  %259 = vmax.xlane.f32.xlu0 %v210
  %v260 = vpop.xlane.xlu0 %259
  %261 = vmax.xlane.f32.xlu0 %v211
  %v262 = vpop.xlane.xlu0 %261
  %263 = vmax.xlane.f32.xlu0 %v212
  %v264 = vpop.xlane.xlu0 %263
  %265 = vmax.xlane.f32.xlu0 %v213
  %v266 = vpop.xlane.xlu0 %265
  %267 = vmax.xlane.f32.xlu0 %v214
  %v268 = vpop.xlane.xlu0 %267
  %269 = vmax.xlane.f32.xlu0 %v215
  %v270 = vpop.xlane.xlu0 %269
  %271 = vmax.xlane.f32.xlu0 %v216
  %v272 = vpop.xlane.xlu0 %271
  %273 = vmax.xlane.f32.xlu0 %v217
  %v274 = vpop.xlane.xlu0 %273
  %275 = vmax.xlane.f32.xlu0 %v218
  %v276 = vpop.xlane.xlu0 %275
  %277 = vmax.xlane.f32.xlu0 %v219
  %v278 = vpop.xlane.xlu0 %277
  %279 = vmax.xlane.f32.xlu0 %v220
  %v280 = vpop.xlane.xlu0 %279
  %281 = vmax.xlane.f32.xlu0 %v221
  %v282 = vpop.xlane.xlu0 %281
  %283 = vmax.xlane.f32.xlu0 %v222
  %v284 = vpop.xlane.xlu0 %283
  %285 = vmax.xlane.f32.xlu0 %v223
  %v286 = vpop.xlane.xlu0 %285
  %287 = vmax.xlane.f32.xlu0 %v224
  %v288 = vpop.xlane.xlu0 %287
  %289 = vmax.xlane.f32.xlu0 %v225
  %v290 = vpop.xlane.xlu0 %289
  %291 = vmax.xlane.f32.xlu0 %v226
  %v292 = vpop.xlane.xlu0 %291
  %293 = vmax.xlane.f32.xlu0 %v227
  %v294 = vpop.xlane.xlu0 %293
  %295 = vmax.xlane.f32.xlu0 %v228
  %v296 = vpop.xlane.xlu0 %295
  %297 = vmax.xlane.f32.xlu0 %v229
  %v298 = vpop.xlane.xlu0 %297
  %299 = vmax.xlane.f32.xlu0 %v230
  %v300 = vpop.xlane.xlu0 %299
  %301 = vmax.xlane.f32.xlu0 %v231
  %v302 = vpop.xlane.xlu0 %301
  %303 = vmax.xlane.f32.xlu0 %v232
  %v304 = vpop.xlane.xlu0 %303
  %v305 = vlaneseq
  %v306 = vand.u32 %v305, 127
  %vm307 = vcmp.ge.f32.partialorder %v197, %v234
  %vm308 = vcmp.ge.f32.partialorder %v198, %v236
  %vm309 = vcmp.ge.f32.partialorder %v199, %v238
  %vm310 = vcmp.ge.f32.partialorder %v200, %v240
  %vm311 = vcmp.ge.f32.partialorder %v201, %v242
  %vm312 = vcmp.ge.f32.partialorder %v202, %v244
  %vm313 = vcmp.ge.f32.partialorder %v203, %v246
  %vm314 = vcmp.ge.f32.partialorder %v204, %v248
  %vm315 = vcmp.ge.f32.partialorder %v205, %v250
  %vm316 = vcmp.ge.f32.partialorder %v206, %v252
  %vm317 = vcmp.ge.f32.partialorder %v207, %v254
  %vm318 = vcmp.ge.f32.partialorder %v208, %v256
  %vm319 = vcmp.ge.f32.partialorder %v209, %v258
  %vm320 = vcmp.ge.f32.partialorder %v210, %v260
  %vm321 = vcmp.ge.f32.partialorder %v211, %v262
  %vm322 = vcmp.ge.f32.partialorder %v212, %v264
  %vm323 = vcmp.ge.f32.partialorder %v213, %v266
  %vm324 = vcmp.ge.f32.partialorder %v214, %v268
  %vm325 = vcmp.ge.f32.partialorder %v215, %v270
  %vm326 = vcmp.ge.f32.partialorder %v216, %v272
  %vm327 = vcmp.ge.f32.partialorder %v217, %v274
  %vm328 = vcmp.ge.f32.partialorder %v218, %v276
  %vm329 = vcmp.ge.f32.partialorder %v219, %v278
  %vm330 = vcmp.ge.f32.partialorder %v220, %v280
  %vm331 = vcmp.ge.f32.partialorder %v221, %v282
  %vm332 = vcmp.ge.f32.partialorder %v222, %v284
  %vm333 = vcmp.ge.f32.partialorder %v223, %v286
  %vm334 = vcmp.ge.f32.partialorder %v224, %v288
  %vm335 = vcmp.ge.f32.partialorder %v225, %v290
  %vm336 = vcmp.ge.f32.partialorder %v226, %v292
  %vm337 = vcmp.ge.f32.partialorder %v227, %v294
  %vm338 = vcmp.ge.f32.partialorder %v228, %v296
  %vm339 = vcmp.ge.f32.partialorder %v229, %v298
  %vm340 = vcmp.ge.f32.partialorder %v230, %v300
  %vm341 = vcmp.ge.f32.partialorder %v231, %v302
  %vm342 = vcmp.ge.f32.partialorder %v232, %v304
  %v343 = vsel %vm307, %v306, 128
  %v344 = vsel %vm308, %v306, 128
  %v345 = vsel %vm309, %v306, 128
  %v346 = vsel %vm310, %v306, 128
  %v347 = vsel %vm311, %v306, 128
  %v348 = vsel %vm312, %v306, 128
  %v349 = vsel %vm313, %v306, 128
  %v350 = vsel %vm314, %v306, 128
  %v351 = vsel %vm315, %v306, 128
  %v352 = vsel %vm316, %v306, 128
  %v353 = vsel %vm317, %v306, 128
  %v354 = vsel %vm318, %v306, 128
  %v355 = vsel %vm319, %v306, 128
  %v356 = vsel %vm320, %v306, 128
  %v357 = vsel %vm321, %v306, 128
  %v358 = vsel %vm322, %v306, 128
  %v359 = vsel %vm323, %v306, 128
  %v360 = vsel %vm324, %v306, 128
  %v361 = vsel %vm325, %v306, 128
  %v362 = vsel %vm326, %v306, 128
  %v363 = vsel %vm327, %v306, 128
  %v364 = vsel %vm328, %v306, 128
  %v365 = vsel %vm329, %v306, 128
  %v366 = vsel %vm330, %v306, 128
  %v367 = vsel %vm331, %v306, 128
  %v368 = vsel %vm332, %v306, 128
  %v369 = vsel %vm333, %v306, 128
  %v370 = vsel %vm334, %v306, 128
  %v371 = vsel %vm335, %v306, 128
  %v372 = vsel %vm336, %v306, 128
  %v373 = vsel %vm337, %v306, 128
  %v374 = vsel %vm338, %v306, 128
  %v375 = vsel %vm339, %v306, 128
  %v376 = vsel %vm340, %v306, 128
  %v377 = vsel %vm341, %v306, 128
  %v378 = vsel %vm342, %v306, 128
  %v379 = vand.u32 %v343, 65535
  %v380 = vshra.s32 %v343, 16
  %v381 = vcvt.s32.f32 %v379
  %v382 = vcvt.s32.f32 %v380
  %383 = vmin.xlane.f32.xlu0 %v382
  %v384 = vpop.xlane.xlu0 %383
  %vm385 = vcmp.eq.f32.partialorder %v382, %v384
  %v386 = vsel %vm385, %v381, inf
  %387 = vmin.xlane.f32.xlu0 %v386
  %v388 = vpop.xlane.xlu0 %387
  %v389 = vcvt.f32.s32 %v388
  %v390 = vcvt.f32.s32 %v384
  %v391 = vshll.u32 %v390, 16
  %v392 = vadd.s32 %v391, %v389
  %v393 = vand.u32 %v344, 65535
  %v394 = vshra.s32 %v344, 16
  %v395 = vcvt.s32.f32 %v393
  %v396 = vcvt.s32.f32 %v394
  %397 = vmin.xlane.f32.xlu0 %v396
  %v398 = vpop.xlane.xlu0 %397
  %vm399 = vcmp.eq.f32.partialorder %v396, %v398
  %v400 = vsel %vm399, %v395, inf
  %401 = vmin.xlane.f32.xlu0 %v400
  %v402 = vpop.xlane.xlu0 %401
  %v403 = vcvt.f32.s32 %v402
  %v404 = vcvt.f32.s32 %v398
  %v405 = vshll.u32 %v404, 16
  %v406 = vadd.s32 %v405, %v403
  %v407 = vand.u32 %v345, 65535
  %v408 = vshra.s32 %v345, 16
  %v409 = vcvt.s32.f32 %v407
  %v410 = vcvt.s32.f32 %v408
  %411 = vmin.xlane.f32.xlu0 %v410
  %v412 = vpop.xlane.xlu0 %411
  %vm413 = vcmp.eq.f32.partialorder %v410, %v412
  %v414 = vsel %vm413, %v409, inf
  %415 = vmin.xlane.f32.xlu0 %v414
  %v416 = vpop.xlane.xlu0 %415
  %v417 = vcvt.f32.s32 %v416
  %v418 = vcvt.f32.s32 %v412
  %v419 = vshll.u32 %v418, 16
  %v420 = vadd.s32 %v419, %v417
  %v421 = vand.u32 %v346, 65535
  %v422 = vshra.s32 %v346, 16
  %v423 = vcvt.s32.f32 %v421
  %v424 = vcvt.s32.f32 %v422
  %425 = vmin.xlane.f32.xlu0 %v424
  %v426 = vpop.xlane.xlu0 %425
  %vm427 = vcmp.eq.f32.partialorder %v424, %v426
  %v428 = vsel %vm427, %v423, inf
  %429 = vmin.xlane.f32.xlu0 %v428
  %v430 = vpop.xlane.xlu0 %429
  %v431 = vcvt.f32.s32 %v430
  %v432 = vcvt.f32.s32 %v426
  %v433 = vshll.u32 %v432, 16
  %v434 = vadd.s32 %v433, %v431
  %v435 = vand.u32 %v347, 65535
  %v436 = vshra.s32 %v347, 16
  %v437 = vcvt.s32.f32 %v435
  %v438 = vcvt.s32.f32 %v436
  %439 = vmin.xlane.f32.xlu0 %v438
  %v440 = vpop.xlane.xlu0 %439
  %vm441 = vcmp.eq.f32.partialorder %v438, %v440
  %v442 = vsel %vm441, %v437, inf
  %443 = vmin.xlane.f32.xlu0 %v442
  %v444 = vpop.xlane.xlu0 %443
  %v445 = vcvt.f32.s32 %v444
  %v446 = vcvt.f32.s32 %v440
  %v447 = vshll.u32 %v446, 16
  %v448 = vadd.s32 %v447, %v445
  %v449 = vand.u32 %v348, 65535
  %v450 = vshra.s32 %v348, 16
  %v451 = vcvt.s32.f32 %v449
  %v452 = vcvt.s32.f32 %v450
  %453 = vmin.xlane.f32.xlu0 %v452
  %v454 = vpop.xlane.xlu0 %453
  %vm455 = vcmp.eq.f32.partialorder %v452, %v454
  %v456 = vsel %vm455, %v451, inf
  %457 = vmin.xlane.f32.xlu0 %v456
  %v458 = vpop.xlane.xlu0 %457
  %v459 = vcvt.f32.s32 %v458
  %v460 = vcvt.f32.s32 %v454
  %v461 = vshll.u32 %v460, 16
  %v462 = vadd.s32 %v461, %v459
  %v463 = vand.u32 %v349, 65535
  %v464 = vshra.s32 %v349, 16
  %v465 = vcvt.s32.f32 %v463
  %v466 = vcvt.s32.f32 %v464
  %467 = vmin.xlane.f32.xlu0 %v466
  %v468 = vpop.xlane.xlu0 %467
  %vm469 = vcmp.eq.f32.partialorder %v466, %v468
  %v470 = vsel %vm469, %v465, inf
  %471 = vmin.xlane.f32.xlu0 %v470
  %v472 = vpop.xlane.xlu0 %471
  %v473 = vcvt.f32.s32 %v472
  %v474 = vcvt.f32.s32 %v468
  %v475 = vshll.u32 %v474, 16
  %v476 = vadd.s32 %v475, %v473
  %v477 = vand.u32 %v350, 65535
  %v478 = vshra.s32 %v350, 16
  %v479 = vcvt.s32.f32 %v477
  %v480 = vcvt.s32.f32 %v478
  %481 = vmin.xlane.f32.xlu0 %v480
  %v482 = vpop.xlane.xlu0 %481
  %vm483 = vcmp.eq.f32.partialorder %v480, %v482
  %v484 = vsel %vm483, %v479, inf
  %485 = vmin.xlane.f32.xlu0 %v484
  %v486 = vpop.xlane.xlu0 %485
  %v487 = vcvt.f32.s32 %v486
  %v488 = vcvt.f32.s32 %v482
  %v489 = vshll.u32 %v488, 16
  %v490 = vadd.s32 %v489, %v487
  %v491 = vand.u32 %v351, 65535
  %v492 = vshra.s32 %v351, 16
  %v493 = vcvt.s32.f32 %v491
  %v494 = vcvt.s32.f32 %v492
  %495 = vmin.xlane.f32.xlu0 %v494
  %v496 = vpop.xlane.xlu0 %495
  %vm497 = vcmp.eq.f32.partialorder %v494, %v496
  %v498 = vsel %vm497, %v493, inf
  %499 = vmin.xlane.f32.xlu0 %v498
  %v500 = vpop.xlane.xlu0 %499
  %v501 = vcvt.f32.s32 %v500
  %v502 = vcvt.f32.s32 %v496
  %v503 = vshll.u32 %v502, 16
  %v504 = vadd.s32 %v503, %v501
  %v505 = vand.u32 %v352, 65535
  %v506 = vshra.s32 %v352, 16
  %v507 = vcvt.s32.f32 %v505
  %v508 = vcvt.s32.f32 %v506
  %509 = vmin.xlane.f32.xlu0 %v508
  %v510 = vpop.xlane.xlu0 %509
  %vm511 = vcmp.eq.f32.partialorder %v508, %v510
  %v512 = vsel %vm511, %v507, inf
  %513 = vmin.xlane.f32.xlu0 %v512
  %v514 = vpop.xlane.xlu0 %513
  %v515 = vcvt.f32.s32 %v514
  %v516 = vcvt.f32.s32 %v510
  %v517 = vshll.u32 %v516, 16
  %v518 = vadd.s32 %v517, %v515
  %v519 = vand.u32 %v353, 65535
  %v520 = vshra.s32 %v353, 16
  %v521 = vcvt.s32.f32 %v519
  %v522 = vcvt.s32.f32 %v520
  %523 = vmin.xlane.f32.xlu0 %v522
  %v524 = vpop.xlane.xlu0 %523
  %vm525 = vcmp.eq.f32.partialorder %v522, %v524
  %v526 = vsel %vm525, %v521, inf
  %527 = vmin.xlane.f32.xlu0 %v526
  %v528 = vpop.xlane.xlu0 %527
  %v529 = vcvt.f32.s32 %v528
  %v530 = vcvt.f32.s32 %v524
  %v531 = vshll.u32 %v530, 16
  %v532 = vadd.s32 %v531, %v529
  %v533 = vand.u32 %v354, 65535
  %v534 = vshra.s32 %v354, 16
  %v535 = vcvt.s32.f32 %v533
  %v536 = vcvt.s32.f32 %v534
  %537 = vmin.xlane.f32.xlu0 %v536
  %v538 = vpop.xlane.xlu0 %537
  %vm539 = vcmp.eq.f32.partialorder %v536, %v538
  %v540 = vsel %vm539, %v535, inf
  %541 = vmin.xlane.f32.xlu0 %v540
  %v542 = vpop.xlane.xlu0 %541
  %v543 = vcvt.f32.s32 %v542
  %v544 = vcvt.f32.s32 %v538
  %v545 = vshll.u32 %v544, 16
  %v546 = vadd.s32 %v545, %v543
  %v547 = vand.u32 %v355, 65535
  %v548 = vshra.s32 %v355, 16
  %v549 = vcvt.s32.f32 %v547
  %v550 = vcvt.s32.f32 %v548
  %551 = vmin.xlane.f32.xlu0 %v550
  %v552 = vpop.xlane.xlu0 %551
  %vm553 = vcmp.eq.f32.partialorder %v550, %v552
  %v554 = vsel %vm553, %v549, inf
  %555 = vmin.xlane.f32.xlu0 %v554
  %v556 = vpop.xlane.xlu0 %555
  %v557 = vcvt.f32.s32 %v556
  %v558 = vcvt.f32.s32 %v552
  %v559 = vshll.u32 %v558, 16
  %v560 = vadd.s32 %v559, %v557
  %v561 = vand.u32 %v356, 65535
  %v562 = vshra.s32 %v356, 16
  %v563 = vcvt.s32.f32 %v561
  %v564 = vcvt.s32.f32 %v562
  %565 = vmin.xlane.f32.xlu0 %v564
  %v566 = vpop.xlane.xlu0 %565
  %vm567 = vcmp.eq.f32.partialorder %v564, %v566
  %v568 = vsel %vm567, %v563, inf
  %569 = vmin.xlane.f32.xlu0 %v568
  %v570 = vpop.xlane.xlu0 %569
  %v571 = vcvt.f32.s32 %v570
  %v572 = vcvt.f32.s32 %v566
  %v573 = vshll.u32 %v572, 16
  %v574 = vadd.s32 %v573, %v571
  %v575 = vand.u32 %v357, 65535
  %v576 = vshra.s32 %v357, 16
  %v577 = vcvt.s32.f32 %v575
  %v578 = vcvt.s32.f32 %v576
  %579 = vmin.xlane.f32.xlu0 %v578
  %v580 = vpop.xlane.xlu0 %579
  %vm581 = vcmp.eq.f32.partialorder %v578, %v580
  %v582 = vsel %vm581, %v577, inf
  %583 = vmin.xlane.f32.xlu0 %v582
  %v584 = vpop.xlane.xlu0 %583
  %v585 = vcvt.f32.s32 %v584
  %v586 = vcvt.f32.s32 %v580
  %v587 = vshll.u32 %v586, 16
  %v588 = vadd.s32 %v587, %v585
  %v589 = vand.u32 %v358, 65535
  %v590 = vshra.s32 %v358, 16
  %v591 = vcvt.s32.f32 %v589
  %v592 = vcvt.s32.f32 %v590
  %593 = vmin.xlane.f32.xlu0 %v592
  %v594 = vpop.xlane.xlu0 %593
  %vm595 = vcmp.eq.f32.partialorder %v592, %v594
  %v596 = vsel %vm595, %v591, inf
  %597 = vmin.xlane.f32.xlu0 %v596
  %v598 = vpop.xlane.xlu0 %597
  %v599 = vcvt.f32.s32 %v598
  %v600 = vcvt.f32.s32 %v594
  %v601 = vshll.u32 %v600, 16
  %v602 = vadd.s32 %v601, %v599
  %v603 = vand.u32 %v359, 65535
  %v604 = vshra.s32 %v359, 16
  %v605 = vcvt.s32.f32 %v603
  %v606 = vcvt.s32.f32 %v604
  %607 = vmin.xlane.f32.xlu0 %v606
  %v608 = vpop.xlane.xlu0 %607
  %vm609 = vcmp.eq.f32.partialorder %v606, %v608
  %v610 = vsel %vm609, %v605, inf
  %611 = vmin.xlane.f32.xlu0 %v610
  %v612 = vpop.xlane.xlu0 %611
  %v613 = vcvt.f32.s32 %v612
  %v614 = vcvt.f32.s32 %v608
  %v615 = vshll.u32 %v614, 16
  %v616 = vadd.s32 %v615, %v613
  %v617 = vand.u32 %v360, 65535
  %v618 = vshra.s32 %v360, 16
  %v619 = vcvt.s32.f32 %v617
  %v620 = vcvt.s32.f32 %v618
  %621 = vmin.xlane.f32.xlu0 %v620
  %v622 = vpop.xlane.xlu0 %621
  %vm623 = vcmp.eq.f32.partialorder %v620, %v622
  %v624 = vsel %vm623, %v619, inf
  %625 = vmin.xlane.f32.xlu0 %v624
  %v626 = vpop.xlane.xlu0 %625
  %v627 = vcvt.f32.s32 %v626
  %v628 = vcvt.f32.s32 %v622
  %v629 = vshll.u32 %v628, 16
  %v630 = vadd.s32 %v629, %v627
  %v631 = vand.u32 %v361, 65535
  %v632 = vshra.s32 %v361, 16
  %v633 = vcvt.s32.f32 %v631
  %v634 = vcvt.s32.f32 %v632
  %635 = vmin.xlane.f32.xlu0 %v634
  %v636 = vpop.xlane.xlu0 %635
  %vm637 = vcmp.eq.f32.partialorder %v634, %v636
  %v638 = vsel %vm637, %v633, inf
  %639 = vmin.xlane.f32.xlu0 %v638
  %v640 = vpop.xlane.xlu0 %639
  %v641 = vcvt.f32.s32 %v640
  %v642 = vcvt.f32.s32 %v636
  %v643 = vshll.u32 %v642, 16
  %v644 = vadd.s32 %v643, %v641
  %v645 = vand.u32 %v362, 65535
  %v646 = vshra.s32 %v362, 16
  %v647 = vcvt.s32.f32 %v645
  %v648 = vcvt.s32.f32 %v646
  %649 = vmin.xlane.f32.xlu0 %v648
  %v650 = vpop.xlane.xlu0 %649
  %vm651 = vcmp.eq.f32.partialorder %v648, %v650
  %v652 = vsel %vm651, %v647, inf
  %653 = vmin.xlane.f32.xlu0 %v652
  %v654 = vpop.xlane.xlu0 %653
  %v655 = vcvt.f32.s32 %v654
  %v656 = vcvt.f32.s32 %v650
  %v657 = vshll.u32 %v656, 16
  %v658 = vadd.s32 %v657, %v655
  %v659 = vand.u32 %v363, 65535
  %v660 = vshra.s32 %v363, 16
  %v661 = vcvt.s32.f32 %v659
  %v662 = vcvt.s32.f32 %v660
  %663 = vmin.xlane.f32.xlu0 %v662
  %v664 = vpop.xlane.xlu0 %663
  %vm665 = vcmp.eq.f32.partialorder %v662, %v664
  %v666 = vsel %vm665, %v661, inf
  %667 = vmin.xlane.f32.xlu0 %v666
  %v668 = vpop.xlane.xlu0 %667
  %v669 = vcvt.f32.s32 %v668
  %v670 = vcvt.f32.s32 %v664
  %v671 = vshll.u32 %v670, 16
  %v672 = vadd.s32 %v671, %v669
  %v673 = vand.u32 %v364, 65535
  %v674 = vshra.s32 %v364, 16
  %v675 = vcvt.s32.f32 %v673
  %v676 = vcvt.s32.f32 %v674
  %677 = vmin.xlane.f32.xlu0 %v676
  %v678 = vpop.xlane.xlu0 %677
  %vm679 = vcmp.eq.f32.partialorder %v676, %v678
  %v680 = vsel %vm679, %v675, inf
  %681 = vmin.xlane.f32.xlu0 %v680
  %v682 = vpop.xlane.xlu0 %681
  %v683 = vcvt.f32.s32 %v682
  %v684 = vcvt.f32.s32 %v678
  %v685 = vshll.u32 %v684, 16
  %v686 = vadd.s32 %v685, %v683
  %v687 = vand.u32 %v365, 65535
  %v688 = vshra.s32 %v365, 16
  %v689 = vcvt.s32.f32 %v687
  %v690 = vcvt.s32.f32 %v688
  %691 = vmin.xlane.f32.xlu0 %v690
  %v692 = vpop.xlane.xlu0 %691
  %vm693 = vcmp.eq.f32.partialorder %v690, %v692
  %v694 = vsel %vm693, %v689, inf
  %695 = vmin.xlane.f32.xlu0 %v694
  %v696 = vpop.xlane.xlu0 %695
  %v697 = vcvt.f32.s32 %v696
  %v698 = vcvt.f32.s32 %v692
  %v699 = vshll.u32 %v698, 16
  %v700 = vadd.s32 %v699, %v697
  %v701 = vand.u32 %v366, 65535
  %v702 = vshra.s32 %v366, 16
  %v703 = vcvt.s32.f32 %v701
  %v704 = vcvt.s32.f32 %v702
  %705 = vmin.xlane.f32.xlu0 %v704
  %v706 = vpop.xlane.xlu0 %705
  %vm707 = vcmp.eq.f32.partialorder %v704, %v706
  %v708 = vsel %vm707, %v703, inf
  %709 = vmin.xlane.f32.xlu0 %v708
  %v710 = vpop.xlane.xlu0 %709
  %v711 = vcvt.f32.s32 %v710
  %v712 = vcvt.f32.s32 %v706
  %v713 = vshll.u32 %v712, 16
  %v714 = vadd.s32 %v713, %v711
  %v715 = vand.u32 %v367, 65535
  %v716 = vshra.s32 %v367, 16
  %v717 = vcvt.s32.f32 %v715
  %v718 = vcvt.s32.f32 %v716
  %719 = vmin.xlane.f32.xlu0 %v718
  %v720 = vpop.xlane.xlu0 %719
  %vm721 = vcmp.eq.f32.partialorder %v718, %v720
  %v722 = vsel %vm721, %v717, inf
  %723 = vmin.xlane.f32.xlu0 %v722
  %v724 = vpop.xlane.xlu0 %723
  %v725 = vcvt.f32.s32 %v724
  %v726 = vcvt.f32.s32 %v720
  %v727 = vshll.u32 %v726, 16
  %v728 = vadd.s32 %v727, %v725
  %v729 = vand.u32 %v368, 65535
  %v730 = vshra.s32 %v368, 16
  %v731 = vcvt.s32.f32 %v729
  %v732 = vcvt.s32.f32 %v730
  %733 = vmin.xlane.f32.xlu0 %v732
  %v734 = vpop.xlane.xlu0 %733
  %vm735 = vcmp.eq.f32.partialorder %v732, %v734
  %v736 = vsel %vm735, %v731, inf
  %737 = vmin.xlane.f32.xlu0 %v736
  %v738 = vpop.xlane.xlu0 %737
  %v739 = vcvt.f32.s32 %v738
  %v740 = vcvt.f32.s32 %v734
  %v741 = vshll.u32 %v740, 16
  %v742 = vadd.s32 %v741, %v739
  %v743 = vand.u32 %v369, 65535
  %v744 = vshra.s32 %v369, 16
  %v745 = vcvt.s32.f32 %v743
  %v746 = vcvt.s32.f32 %v744
  %747 = vmin.xlane.f32.xlu0 %v746
  %v748 = vpop.xlane.xlu0 %747
  %vm749 = vcmp.eq.f32.partialorder %v746, %v748
  %v750 = vsel %vm749, %v745, inf
  %751 = vmin.xlane.f32.xlu0 %v750
  %v752 = vpop.xlane.xlu0 %751
  %v753 = vcvt.f32.s32 %v752
  %v754 = vcvt.f32.s32 %v748
  %v755 = vshll.u32 %v754, 16
  %v756 = vadd.s32 %v755, %v753
  %v757 = vand.u32 %v370, 65535
  %v758 = vshra.s32 %v370, 16
  %v759 = vcvt.s32.f32 %v757
  %v760 = vcvt.s32.f32 %v758
  %761 = vmin.xlane.f32.xlu0 %v760
  %v762 = vpop.xlane.xlu0 %761
  %vm763 = vcmp.eq.f32.partialorder %v760, %v762
  %v764 = vsel %vm763, %v759, inf
  %765 = vmin.xlane.f32.xlu0 %v764
  %v766 = vpop.xlane.xlu0 %765
  %v767 = vcvt.f32.s32 %v766
  %v768 = vcvt.f32.s32 %v762
  %v769 = vshll.u32 %v768, 16
  %v770 = vadd.s32 %v769, %v767
  %v771 = vand.u32 %v371, 65535
  %v772 = vshra.s32 %v371, 16
  %v773 = vcvt.s32.f32 %v771
  %v774 = vcvt.s32.f32 %v772
  %775 = vmin.xlane.f32.xlu0 %v774
  %v776 = vpop.xlane.xlu0 %775
  %vm777 = vcmp.eq.f32.partialorder %v774, %v776
  %v778 = vsel %vm777, %v773, inf
  %779 = vmin.xlane.f32.xlu0 %v778
  %v780 = vpop.xlane.xlu0 %779
  %v781 = vcvt.f32.s32 %v780
  %v782 = vcvt.f32.s32 %v776
  %v783 = vshll.u32 %v782, 16
  %v784 = vadd.s32 %v783, %v781
  %v785 = vand.u32 %v372, 65535
  %v786 = vshra.s32 %v372, 16
  %v787 = vcvt.s32.f32 %v785
  %v788 = vcvt.s32.f32 %v786
  %789 = vmin.xlane.f32.xlu0 %v788
  %v790 = vpop.xlane.xlu0 %789
  %vm791 = vcmp.eq.f32.partialorder %v788, %v790
  %v792 = vsel %vm791, %v787, inf
  %793 = vmin.xlane.f32.xlu0 %v792
  %v794 = vpop.xlane.xlu0 %793
  %v795 = vcvt.f32.s32 %v794
  %v796 = vcvt.f32.s32 %v790
  %v797 = vshll.u32 %v796, 16
  %v798 = vadd.s32 %v797, %v795
  %v799 = vand.u32 %v373, 65535
  %v800 = vshra.s32 %v373, 16
  %v801 = vcvt.s32.f32 %v799
  %v802 = vcvt.s32.f32 %v800
  %803 = vmin.xlane.f32.xlu0 %v802
  %v804 = vpop.xlane.xlu0 %803
  %vm805 = vcmp.eq.f32.partialorder %v802, %v804
  %v806 = vsel %vm805, %v801, inf
  %807 = vmin.xlane.f32.xlu0 %v806
  %v808 = vpop.xlane.xlu0 %807
  %v809 = vcvt.f32.s32 %v808
  %v810 = vcvt.f32.s32 %v804
  %v811 = vshll.u32 %v810, 16
  %v812 = vadd.s32 %v811, %v809
  %v813 = vand.u32 %v374, 65535
  %v814 = vshra.s32 %v374, 16
  %v815 = vcvt.s32.f32 %v813
  %v816 = vcvt.s32.f32 %v814
  %817 = vmin.xlane.f32.xlu0 %v816
  %v818 = vpop.xlane.xlu0 %817
  %vm819 = vcmp.eq.f32.partialorder %v816, %v818
  %v820 = vsel %vm819, %v815, inf
  %821 = vmin.xlane.f32.xlu0 %v820
  %v822 = vpop.xlane.xlu0 %821
  %v823 = vcvt.f32.s32 %v822
  %v824 = vcvt.f32.s32 %v818
  %v825 = vshll.u32 %v824, 16
  %v826 = vadd.s32 %v825, %v823
  %v827 = vand.u32 %v375, 65535
  %v828 = vshra.s32 %v375, 16
  %v829 = vcvt.s32.f32 %v827
  %v830 = vcvt.s32.f32 %v828
  %831 = vmin.xlane.f32.xlu0 %v830
  %v832 = vpop.xlane.xlu0 %831
  %vm833 = vcmp.eq.f32.partialorder %v830, %v832
  %v834 = vsel %vm833, %v829, inf
  %835 = vmin.xlane.f32.xlu0 %v834
  %v836 = vpop.xlane.xlu0 %835
  %v837 = vcvt.f32.s32 %v836
  %v838 = vcvt.f32.s32 %v832
  %v839 = vshll.u32 %v838, 16
  %v840 = vadd.s32 %v839, %v837
  %v841 = vand.u32 %v376, 65535
  %v842 = vshra.s32 %v376, 16
  %v843 = vcvt.s32.f32 %v841
  %v844 = vcvt.s32.f32 %v842
  %845 = vmin.xlane.f32.xlu0 %v844
  %v846 = vpop.xlane.xlu0 %845
  %vm847 = vcmp.eq.f32.partialorder %v844, %v846
  %v848 = vsel %vm847, %v843, inf
  %849 = vmin.xlane.f32.xlu0 %v848
  %v850 = vpop.xlane.xlu0 %849
  %v851 = vcvt.f32.s32 %v850
  %v852 = vcvt.f32.s32 %v846
  %v853 = vshll.u32 %v852, 16
  %v854 = vadd.s32 %v853, %v851
  %v855 = vand.u32 %v377, 65535
  %v856 = vshra.s32 %v377, 16
  %v857 = vcvt.s32.f32 %v855
  %v858 = vcvt.s32.f32 %v856
  %859 = vmin.xlane.f32.xlu0 %v858
  %v860 = vpop.xlane.xlu0 %859
  %vm861 = vcmp.eq.f32.partialorder %v858, %v860
  %v862 = vsel %vm861, %v857, inf
  %863 = vmin.xlane.f32.xlu0 %v862
  %v864 = vpop.xlane.xlu0 %863
  %v865 = vcvt.f32.s32 %v864
  %v866 = vcvt.f32.s32 %v860
  %v867 = vshll.u32 %v866, 16
  %v868 = vadd.s32 %v867, %v865
  %v869 = vand.u32 %v378, 65535
  %v870 = vshra.s32 %v378, 16
  %v871 = vcvt.s32.f32 %v869
  %v872 = vcvt.s32.f32 %v870
  %873 = vmin.xlane.f32.xlu0 %v872
  %v874 = vpop.xlane.xlu0 %873
  %vm875 = vcmp.eq.f32.partialorder %v872, %v874
  %v876 = vsel %vm875, %v871, inf
  %877 = vmin.xlane.f32.xlu0 %v876
  %v878 = vpop.xlane.xlu0 %877
  %v879 = vcvt.f32.s32 %v878
  %v880 = vcvt.f32.s32 %v874
  %v881 = vshll.u32 %v880, 16
  %v882 = vadd.s32 %v881, %v879
  %vm883 = vcmp.eq.s32.totalorder %v306, %v392
  %vm884 = vcmp.eq.s32.totalorder %v306, %v406
  %vm885 = vcmp.eq.s32.totalorder %v306, %v420
  %vm886 = vcmp.eq.s32.totalorder %v306, %v434
  %vm887 = vcmp.eq.s32.totalorder %v306, %v448
  %vm888 = vcmp.eq.s32.totalorder %v306, %v462
  %vm889 = vcmp.eq.s32.totalorder %v306, %v476
  %vm890 = vcmp.eq.s32.totalorder %v306, %v490
  %vm891 = vcmp.eq.s32.totalorder %v306, %v504
  %vm892 = vcmp.eq.s32.totalorder %v306, %v518
  %vm893 = vcmp.eq.s32.totalorder %v306, %v532
  %vm894 = vcmp.eq.s32.totalorder %v306, %v546
  %vm895 = vcmp.eq.s32.totalorder %v306, %v560
  %vm896 = vcmp.eq.s32.totalorder %v306, %v574
  %vm897 = vcmp.eq.s32.totalorder %v306, %v588
  %vm898 = vcmp.eq.s32.totalorder %v306, %v602
  %vm899 = vcmp.eq.s32.totalorder %v306, %v616
  %vm900 = vcmp.eq.s32.totalorder %v306, %v630
  %vm901 = vcmp.eq.s32.totalorder %v306, %v644
  %vm902 = vcmp.eq.s32.totalorder %v306, %v658
  %vm903 = vcmp.eq.s32.totalorder %v306, %v672
  %vm904 = vcmp.eq.s32.totalorder %v306, %v686
  %vm905 = vcmp.eq.s32.totalorder %v306, %v700
  %vm906 = vcmp.eq.s32.totalorder %v306, %v714
  %vm907 = vcmp.eq.s32.totalorder %v306, %v728
  %vm908 = vcmp.eq.s32.totalorder %v306, %v742
  %vm909 = vcmp.eq.s32.totalorder %v306, %v756
  %vm910 = vcmp.eq.s32.totalorder %v306, %v770
  %vm911 = vcmp.eq.s32.totalorder %v306, %v784
  %vm912 = vcmp.eq.s32.totalorder %v306, %v798
  %vm913 = vcmp.eq.s32.totalorder %v306, %v812
  %vm914 = vcmp.eq.s32.totalorder %v306, %v826
  %vm915 = vcmp.eq.s32.totalorder %v306, %v840
  %vm916 = vcmp.eq.s32.totalorder %v306, %v854
  %vm917 = vcmp.eq.s32.totalorder %v306, %v868
  %vm918 = vcmp.eq.s32.totalorder %v306, %v882
  %v919 = vsel %vm883, 1, 0
  %v920 = vsel %vm884, 1, 0
  %v921 = vsel %vm885, 1, 0
  %v922 = vsel %vm886, 1, 0
  %v923 = vsel %vm887, 1, 0
  %v924 = vsel %vm888, 1, 0
  %v925 = vsel %vm889, 1, 0
  %v926 = vsel %vm890, 1, 0
  %v927 = vsel %vm891, 1, 0
  %v928 = vsel %vm892, 1, 0
  %v929 = vsel %vm893, 1, 0
  %v930 = vsel %vm894, 1, 0
  %v931 = vsel %vm895, 1, 0
  %v932 = vsel %vm896, 1, 0
  %v933 = vsel %vm897, 1, 0
  %v934 = vsel %vm898, 1, 0
  %v935 = vsel %vm899, 1, 0
  %v936 = vsel %vm900, 1, 0
  %v937 = vsel %vm901, 1, 0
  %v938 = vsel %vm902, 1, 0
  %v939 = vsel %vm903, 1, 0
  %v940 = vsel %vm904, 1, 0
  %v941 = vsel %vm905, 1, 0
  %v942 = vsel %vm906, 1, 0
  %v943 = vsel %vm907, 1, 0
  %v944 = vsel %vm908, 1, 0
  %v945 = vsel %vm909, 1, 0
  %v946 = vsel %vm910, 1, 0
  %v947 = vsel %vm911, 1, 0
  %v948 = vsel %vm912, 1, 0
  %v949 = vsel %vm913, 1, 0
  %v950 = vsel %vm914, 1, 0
  %v951 = vsel %vm915, 1, 0
  %v952 = vsel %vm916, 1, 0
  %v953 = vsel %vm917, 1, 0
  %v954 = vsel %vm918, 1, 0
  %v955 = vcvt.s32.f32 %v919
  %v956 = vcvt.s32.f32 %v920
  %v957 = vcvt.s32.f32 %v921
  %v958 = vcvt.s32.f32 %v922
  %v959 = vcvt.s32.f32 %v923
  %v960 = vcvt.s32.f32 %v924
  %v961 = vcvt.s32.f32 %v925
  %v962 = vcvt.s32.f32 %v926
  %v963 = vcvt.s32.f32 %v927
  %v964 = vcvt.s32.f32 %v928
  %v965 = vcvt.s32.f32 %v929
  %v966 = vcvt.s32.f32 %v930
  %v967 = vcvt.s32.f32 %v931
  %v968 = vcvt.s32.f32 %v932
  %v969 = vcvt.s32.f32 %v933
  %v970 = vcvt.s32.f32 %v934
  %v971 = vcvt.s32.f32 %v935
  %v972 = vcvt.s32.f32 %v936
  %v973 = vcvt.s32.f32 %v937
  %v974 = vcvt.s32.f32 %v938
  %v975 = vcvt.s32.f32 %v939
  %v976 = vcvt.s32.f32 %v940
  %v977 = vcvt.s32.f32 %v941
  %v978 = vcvt.s32.f32 %v942
  %v979 = vcvt.s32.f32 %v943
  %v980 = vcvt.s32.f32 %v944
  %v981 = vcvt.s32.f32 %v945
  %v982 = vcvt.s32.f32 %v946
  %v983 = vcvt.s32.f32 %v947
  %v984 = vcvt.s32.f32 %v948
  %v985 = vcvt.s32.f32 %v949
  %v986 = vcvt.s32.f32 %v950
  %v987 = vcvt.s32.f32 %v951
  %v988 = vcvt.s32.f32 %v952
  %v989 = vcvt.s32.f32 %v953
  %v990 = vcvt.s32.f32 %v954
  %991 = vmatpush.msra.mxu0 %v67
  %992 = vmatpush.msra.mxu0 %v66
  %993 = vmatpush.msra.mxu0 %v65
  %994 = vmatpush.msra.mxu0 %v64
  %995 = vmatpush.msra.mxu0 %v63
  %996 = vmatpush.msra.mxu0 %v62
  %997 = vmatpush.msra.mxu0 %v61
  %998 = vmatpush.msra.mxu0 %v60
  %999 = vmatpush.msra.mxu0 %v59
  %1000 = vmatpush.msra.mxu0 %v58
  %1001 = vmatpush.msra.mxu0 %v57
  %1002 = vmatpush.msra.mxu0 %v56
  %1003 = vmatpush.msra.mxu0 %v55
  %1004 = vmatpush.msra.mxu0 %v54
  %1005 = vmatpush.msra.mxu0 %v53
  %1006 = vmatpush.msra.mxu0 %v52
  %1007 = vmatmul.f32.gmra.mxu0 %v955
  %v1008 = vpop.f32.mrf.mxu0
  %v1009 = vadd.f32 0.0, %v1008
  %1010 = vmatmul.f32.gmra.mxu0 %v956
  %v1011 = vpop.f32.mrf.mxu0
  %v1012 = vadd.f32 0.0, %v1011
  %1013 = vmatmul.f32.gmra.mxu0 %v957
  %v1014 = vpop.f32.mrf.mxu0
  %v1015 = vadd.f32 0.0, %v1014
  %1016 = vmatmul.f32.gmra.mxu0 %v958
  %v1017 = vpop.f32.mrf.mxu0
  %v1018 = vadd.f32 0.0, %v1017
  %1019 = vmatmul.f32.gmra.mxu0 %v959
  %v1020 = vpop.f32.mrf.mxu0
  %v1021 = vadd.f32 0.0, %v1020
  %1022 = vmatmul.f32.gmra.mxu0 %v960
  %v1023 = vpop.f32.mrf.mxu0
  %v1024 = vadd.f32 0.0, %v1023
  %1025 = vmatmul.f32.gmra.mxu0 %v961
  %v1026 = vpop.f32.mrf.mxu0
  %v1027 = vadd.f32 0.0, %v1026
  %1028 = vmatmul.f32.gmra.mxu0 %v962
  %v1029 = vpop.f32.mrf.mxu0
  %v1030 = vadd.f32 0.0, %v1029
  %1031 = vmatmul.f32.gmra.mxu0 %v963
  %v1032 = vpop.f32.mrf.mxu0
  %v1033 = vadd.f32 0.0, %v1032
  %1034 = vmatmul.f32.gmra.mxu0 %v964
  %v1035 = vpop.f32.mrf.mxu0
  %v1036 = vadd.f32 0.0, %v1035
  %1037 = vmatmul.f32.gmra.mxu0 %v965
  %v1038 = vpop.f32.mrf.mxu0
  %v1039 = vadd.f32 0.0, %v1038
  %1040 = vmatmul.f32.gmra.mxu0 %v966
  %v1041 = vpop.f32.mrf.mxu0
  %v1042 = vadd.f32 0.0, %v1041
  %1043 = vmatmul.f32.gmra.mxu0 %v967
  %v1044 = vpop.f32.mrf.mxu0
  %v1045 = vadd.f32 0.0, %v1044
  %1046 = vmatmul.f32.gmra.mxu0 %v968
  %v1047 = vpop.f32.mrf.mxu0
  %v1048 = vadd.f32 0.0, %v1047
  %1049 = vmatmul.f32.gmra.mxu0 %v969
  %v1050 = vpop.f32.mrf.mxu0
  %v1051 = vadd.f32 0.0, %v1050
  %1052 = vmatmul.f32.gmra.mxu0 %v970
  %v1053 = vpop.f32.mrf.mxu0
  %v1054 = vadd.f32 0.0, %v1053
  %1055 = vmatmul.f32.gmra.mxu0 %v971
  %v1056 = vpop.f32.mrf.mxu0
  %v1057 = vadd.f32 0.0, %v1056
  %1058 = vmatmul.f32.gmra.mxu0 %v972
  %v1059 = vpop.f32.mrf.mxu0
  %v1060 = vadd.f32 0.0, %v1059
  %1061 = vmatmul.f32.gmra.mxu0 %v973
  %v1062 = vpop.f32.mrf.mxu0
  %v1063 = vadd.f32 0.0, %v1062
  %1064 = vmatmul.f32.gmra.mxu0 %v974
  %v1065 = vpop.f32.mrf.mxu0
  %v1066 = vadd.f32 0.0, %v1065
  %1067 = vmatmul.f32.gmra.mxu0 %v975
  %v1068 = vpop.f32.mrf.mxu0
  %v1069 = vadd.f32 0.0, %v1068
  %1070 = vmatmul.f32.gmra.mxu0 %v976
  %v1071 = vpop.f32.mrf.mxu0
  %v1072 = vadd.f32 0.0, %v1071
  %1073 = vmatmul.f32.gmra.mxu0 %v977
  %v1074 = vpop.f32.mrf.mxu0
  %v1075 = vadd.f32 0.0, %v1074
  %1076 = vmatmul.f32.gmra.mxu0 %v978
  %v1077 = vpop.f32.mrf.mxu0
  %v1078 = vadd.f32 0.0, %v1077
  %1079 = vmatmul.f32.gmra.mxu0 %v979
  %v1080 = vpop.f32.mrf.mxu0
  %v1081 = vadd.f32 0.0, %v1080
  %1082 = vmatmul.f32.gmra.mxu0 %v980
  %v1083 = vpop.f32.mrf.mxu0
  %v1084 = vadd.f32 0.0, %v1083
  %1085 = vmatmul.f32.gmra.mxu0 %v981
  %v1086 = vpop.f32.mrf.mxu0
  %v1087 = vadd.f32 0.0, %v1086
  %1088 = vmatmul.f32.gmra.mxu0 %v982
  %v1089 = vpop.f32.mrf.mxu0
  %v1090 = vadd.f32 0.0, %v1089
  %1091 = vmatmul.f32.gmra.mxu0 %v983
  %v1092 = vpop.f32.mrf.mxu0
  %v1093 = vadd.f32 0.0, %v1092
  %1094 = vmatmul.f32.gmra.mxu0 %v984
  %v1095 = vpop.f32.mrf.mxu0
  %v1096 = vadd.f32 0.0, %v1095
  %1097 = vmatmul.f32.gmra.mxu0 %v985
  %v1098 = vpop.f32.mrf.mxu0
  %v1099 = vadd.f32 0.0, %v1098
  %1100 = vmatmul.f32.gmra.mxu0 %v986
  %v1101 = vpop.f32.mrf.mxu0
  %v1102 = vadd.f32 0.0, %v1101
  %1103 = vmatmul.f32.gmra.mxu0 %v987
  %v1104 = vpop.f32.mrf.mxu0
  %v1105 = vadd.f32 0.0, %v1104
  %1106 = vmatmul.f32.gmra.mxu0 %v988
  %v1107 = vpop.f32.mrf.mxu0
  %v1108 = vadd.f32 0.0, %v1107
  %1109 = vmatmul.f32.gmra.mxu0 %v989
  %v1110 = vpop.f32.mrf.mxu0
  %v1111 = vadd.f32 0.0, %v1110
  %1112 = vmatmul.f32.gmra.mxu0 %v990
  %v1113 = vpop.f32.mrf.mxu0
  %v1114 = vadd.f32 0.0, %v1113
  %1115 = vdwg.mxu0
  %1116 = vst [vmem:[%s3] sm:$0xff] %v1009
  %1117 = vst [vmem:[%s3 + $0x8] sm:$0xff] %v1012
  %1118 = vst [vmem:[%s3 + $0x10] sm:$0xff] %v1015
  %1119 = vst [vmem:[%s3 + $0x18] sm:$0xff] %v1018
  %1120 = vst [vmem:[%s3 + $0x20] sm:$0xff] %v1021
  %1121 = vst [vmem:[%s3 + $0x28] sm:$0xff] %v1024
  %1122 = vst [vmem:[%s3 + $0x30] sm:$0xff] %v1027
  %1123 = vst [vmem:[%s3 + $0x38] sm:$0xff] %v1030
  %1124 = vst [vmem:[%s3 + $0x40] sm:$0xff] %v1033
  %1125 = vst [vmem:[%s3 + $0x48] sm:$0xff] %v1036
  %1126 = vst [vmem:[%s3 + $0x50] sm:$0xff] %v1039
  %1127 = vst [vmem:[%s3 + $0x58] sm:$0xff] %v1042
  %1128 = vst [vmem:[%s3 + $0x60] sm:$0xff] %v1045
  %1129 = vst [vmem:[%s3 + $0x68] sm:$0xff] %v1048
  %1130 = vst [vmem:[%s3 + $0x70] sm:$0xff] %v1051
  %1131 = vst [vmem:[%s3 + $0x78] sm:$0xff] %v1054
  %1132 = vst [vmem:[%s3 + $0x80] sm:$0xff] %v1057
  %1133 = vst [vmem:[%s3 + $0x88] sm:$0xff] %v1060
  %1134 = vst [vmem:[%s3 + $0x90] sm:$0xff] %v1063
  %1135 = vst [vmem:[%s3 + $0x98] sm:$0xff] %v1066
  %1136 = vst [vmem:[%s3 + $0xa0] sm:$0xff] %v1069
  %1137 = vst [vmem:[%s3 + $0xa8] sm:$0xff] %v1072
  %1138 = vst [vmem:[%s3 + $0xb0] sm:$0xff] %v1075
  %1139 = vst [vmem:[%s3 + $0xb8] sm:$0xff] %v1078
  %1140 = vst [vmem:[%s3 + $0xc0] sm:$0xff] %v1081
  %1141 = vst [vmem:[%s3 + $0xc8] sm:$0xff] %v1084
  %1142 = vst [vmem:[%s3 + $0xd0] sm:$0xff] %v1087
  %1143 = vst [vmem:[%s3 + $0xd8] sm:$0xff] %v1090
  %1144 = vst [vmem:[%s3 + $0xe0] sm:$0xff] %v1093
  %1145 = vst [vmem:[%s3 + $0xe8] sm:$0xff] %v1096
  %1146 = vst [vmem:[%s3 + $0xf0] sm:$0xff] %v1099
  %1147 = vst [vmem:[%s3 + $0xf8] sm:$0xff] %v1102
  %1148 = vst [vmem:[%s3 + $0x100] sm:$0xff] %v1105
  %1149 = vst [vmem:[%s3 + $0x108] sm:$0xff] %v1108
  %1150 = vst [vmem:[%s3 + $0x110] sm:$0xff] %v1111
  %1151 = vst [vmem:[%s3 + $0x118] sm:$0xff] %v1114
  %s1152 = smul.u32 0, 288
  %v1153 = vlaneseq
  %v1154 = vshrl.u32 %v1153, 7
  %v1155 = vadd.s32 %v1154, 8
  %v1156 = vadd.s32 %v1154, 16
  %v1157 = vadd.s32 %v1154, 24
  %v1158 = vadd.s32 %v1154, 32
  %v1159 = vadd.s32 %v1154, 40
  %v1160 = vadd.s32 %v1154, 48
  %v1161 = vadd.s32 %v1154, 56
  %v1162 = vadd.s32 %v1154, 64
  %v1163 = vadd.s32 %v1154, 72
  %v1164 = vadd.s32 %v1154, 80
  %v1165 = vadd.s32 %v1154, 88
  %v1166 = vadd.s32 %v1154, 96
  %v1167 = vadd.s32 %v1154, 104
  %v1168 = vadd.s32 %v1154, 112
  %v1169 = vadd.s32 %v1154, 120
  %v1170 = vadd.s32 %v1154, 128
  %v1171 = vadd.s32 %v1154, 136
  %v1172 = vadd.s32 %v1154, 144
  %v1173 = vadd.s32 %v1154, 152
  %v1174 = vadd.s32 %v1154, 160
  %v1175 = vadd.s32 %v1154, 168
  %v1176 = vadd.s32 %v1154, 176
  %v1177 = vadd.s32 %v1154, 184
  %v1178 = vadd.s32 %v1154, 192
  %v1179 = vadd.s32 %v1154, 200
  %v1180 = vadd.s32 %v1154, 208
  %v1181 = vadd.s32 %v1154, 216
  %v1182 = vadd.s32 %v1154, 224
  %v1183 = vadd.s32 %v1154, 232
  %v1184 = vadd.s32 %v1154, 240
  %v1185 = vadd.s32 %v1154, 248
  %v1186 = vadd.s32 %v1154, 256
  %v1187 = vadd.s32 %v1154, 264
  %v1188 = vadd.s32 %v1154, 272
  %v1189 = vadd.s32 %v1154, 280
  %v1190 = vstv %s1152
  %v1191 = vadd.s32 %v1190, %v1154
  %v1192 = vadd.s32 %v1190, %v1155
  %v1193 = vadd.s32 %v1190, %v1156
  %v1194 = vadd.s32 %v1190, %v1157
  %v1195 = vadd.s32 %v1190, %v1158
  %v1196 = vadd.s32 %v1190, %v1159
  %v1197 = vadd.s32 %v1190, %v1160
  %v1198 = vadd.s32 %v1190, %v1161
  %v1199 = vadd.s32 %v1190, %v1162
  %v1200 = vadd.s32 %v1190, %v1163
  %v1201 = vadd.s32 %v1190, %v1164
  %v1202 = vadd.s32 %v1190, %v1165
  %v1203 = vadd.s32 %v1190, %v1166
  %v1204 = vadd.s32 %v1190, %v1167
  %v1205 = vadd.s32 %v1190, %v1168
  %v1206 = vadd.s32 %v1190, %v1169
  %v1207 = vadd.s32 %v1190, %v1170
  %v1208 = vadd.s32 %v1190, %v1171
  %v1209 = vadd.s32 %v1190, %v1172
  %v1210 = vadd.s32 %v1190, %v1173
  %v1211 = vadd.s32 %v1190, %v1174
  %v1212 = vadd.s32 %v1190, %v1175
  %v1213 = vadd.s32 %v1190, %v1176
  %v1214 = vadd.s32 %v1190, %v1177
  %v1215 = vadd.s32 %v1190, %v1178
  %v1216 = vadd.s32 %v1190, %v1179
  %v1217 = vadd.s32 %v1190, %v1180
  %v1218 = vadd.s32 %v1190, %v1181
  %v1219 = vadd.s32 %v1190, %v1182
  %v1220 = vadd.s32 %v1190, %v1183
  %v1221 = vadd.s32 %v1190, %v1184
  %v1222 = vadd.s32 %v1190, %v1185
  %v1223 = vadd.s32 %v1190, %v1186
  %v1224 = vadd.s32 %v1190, %v1187
  %v1225 = vadd.s32 %v1190, %v1188
  %v1226 = vadd.s32 %v1190, %v1189
  %vm1227 = vcmp.lt.s32.totalorder %v1191, 288
  %vm1228 = vcmp.lt.s32.totalorder %v1192, 288
  %vm1229 = vcmp.lt.s32.totalorder %v1193, 288
  %vm1230 = vcmp.lt.s32.totalorder %v1194, 288
  %vm1231 = vcmp.lt.s32.totalorder %v1195, 288
  %vm1232 = vcmp.lt.s32.totalorder %v1196, 288
  %vm1233 = vcmp.lt.s32.totalorder %v1197, 288
  %vm1234 = vcmp.lt.s32.totalorder %v1198, 288
  %vm1235 = vcmp.lt.s32.totalorder %v1199, 288
  %vm1236 = vcmp.lt.s32.totalorder %v1200, 288
  %vm1237 = vcmp.lt.s32.totalorder %v1201, 288
  %vm1238 = vcmp.lt.s32.totalorder %v1202, 288
  %vm1239 = vcmp.lt.s32.totalorder %v1203, 288
  %vm1240 = vcmp.lt.s32.totalorder %v1204, 288
  %vm1241 = vcmp.lt.s32.totalorder %v1205, 288
  %vm1242 = vcmp.lt.s32.totalorder %v1206, 288
  %vm1243 = vcmp.lt.s32.totalorder %v1207, 288
  %vm1244 = vcmp.lt.s32.totalorder %v1208, 288
  %vm1245 = vcmp.lt.s32.totalorder %v1209, 288
  %vm1246 = vcmp.lt.s32.totalorder %v1210, 288
  %vm1247 = vcmp.lt.s32.totalorder %v1211, 288
  %vm1248 = vcmp.lt.s32.totalorder %v1212, 288
  %vm1249 = vcmp.lt.s32.totalorder %v1213, 288
  %vm1250 = vcmp.lt.s32.totalorder %v1214, 288
  %vm1251 = vcmp.lt.s32.totalorder %v1215, 288
  %vm1252 = vcmp.lt.s32.totalorder %v1216, 288
  %vm1253 = vcmp.lt.s32.totalorder %v1217, 288
  %vm1254 = vcmp.lt.s32.totalorder %v1218, 288
  %vm1255 = vcmp.lt.s32.totalorder %v1219, 288
  %vm1256 = vcmp.lt.s32.totalorder %v1220, 288
  %vm1257 = vcmp.lt.s32.totalorder %v1221, 288
  %vm1258 = vcmp.lt.s32.totalorder %v1222, 288
  %vm1259 = vcmp.lt.s32.totalorder %v1223, 288
  %vm1260 = vcmp.lt.s32.totalorder %v1224, 288
  %vm1261 = vcmp.lt.s32.totalorder %v1225, 288
  %vm1262 = vcmp.lt.s32.totalorder %v1226, 288
  %v1263 = vsub.f32 %v1009, %v16
  %v1264 = vsub.f32 %v1012, %v17
  %v1265 = vsub.f32 %v1015, %v18
  %v1266 = vsub.f32 %v1018, %v19
  %v1267 = vsub.f32 %v1021, %v20
  %v1268 = vsub.f32 %v1024, %v21
  %v1269 = vsub.f32 %v1027, %v22
  %v1270 = vsub.f32 %v1030, %v23
  %v1271 = vsub.f32 %v1033, %v24
  %v1272 = vsub.f32 %v1036, %v25
  %v1273 = vsub.f32 %v1039, %v26
  %v1274 = vsub.f32 %v1042, %v27
  %v1275 = vsub.f32 %v1045, %v28
  %v1276 = vsub.f32 %v1048, %v29
  %v1277 = vsub.f32 %v1051, %v30
  %v1278 = vsub.f32 %v1054, %v31
  %v1279 = vsub.f32 %v1057, %v32
  %v1280 = vsub.f32 %v1060, %v33
  %v1281 = vsub.f32 %v1063, %v34
  %v1282 = vsub.f32 %v1066, %v35
  %v1283 = vsub.f32 %v1069, %v36
  %v1284 = vsub.f32 %v1072, %v37
  %v1285 = vsub.f32 %v1075, %v38
  %v1286 = vsub.f32 %v1078, %v39
  %v1287 = vsub.f32 %v1081, %v40
  %v1288 = vsub.f32 %v1084, %v41
  %v1289 = vsub.f32 %v1087, %v42
  %v1290 = vsub.f32 %v1090, %v43
  %v1291 = vsub.f32 %v1093, %v44
  %v1292 = vsub.f32 %v1096, %v45
  %v1293 = vsub.f32 %v1099, %v46
  %v1294 = vsub.f32 %v1102, %v47
  %v1295 = vsub.f32 %v1105, %v48
  %v1296 = vsub.f32 %v1108, %v49
  %v1297 = vsub.f32 %v1111, %v50
  %v1298 = vsub.f32 %v1114, %v51
  %v1299 = vsel %vm1227, 1, 0
  %v1300 = vsel %vm1228, 1, 0
  %v1301 = vsel %vm1229, 1, 0
  %v1302 = vsel %vm1230, 1, 0
  %v1303 = vsel %vm1231, 1, 0
  %v1304 = vsel %vm1232, 1, 0
  %v1305 = vsel %vm1233, 1, 0
  %v1306 = vsel %vm1234, 1, 0
  %v1307 = vsel %vm1235, 1, 0
  %v1308 = vsel %vm1236, 1, 0
  %v1309 = vsel %vm1237, 1, 0
  %v1310 = vsel %vm1238, 1, 0
  %v1311 = vsel %vm1239, 1, 0
  %v1312 = vsel %vm1240, 1, 0
  %v1313 = vsel %vm1241, 1, 0
  %v1314 = vsel %vm1242, 1, 0
  %v1315 = vsel %vm1243, 1, 0
  %v1316 = vsel %vm1244, 1, 0
  %v1317 = vsel %vm1245, 1, 0
  %v1318 = vsel %vm1246, 1, 0
  %v1319 = vsel %vm1247, 1, 0
  %v1320 = vsel %vm1248, 1, 0
  %v1321 = vsel %vm1249, 1, 0
  %v1322 = vsel %vm1250, 1, 0
  %v1323 = vsel %vm1251, 1, 0
  %v1324 = vsel %vm1252, 1, 0
  %v1325 = vsel %vm1253, 1, 0
  %v1326 = vsel %vm1254, 1, 0
  %v1327 = vsel %vm1255, 1, 0
  %v1328 = vsel %vm1256, 1, 0
  %v1329 = vsel %vm1257, 1, 0
  %v1330 = vsel %vm1258, 1, 0
  %v1331 = vsel %vm1259, 1, 0
  %v1332 = vsel %vm1260, 1, 0
  %v1333 = vsel %vm1261, 1, 0
  %v1334 = vsel %vm1262, 1, 0
  %vm1335 = vcmp.eq.s32.totalorder %v1299, 1
  %vm1336 = vcmp.eq.s32.totalorder %v1300, 1
  %vm1337 = vcmp.eq.s32.totalorder %v1301, 1
  %vm1338 = vcmp.eq.s32.totalorder %v1302, 1
  %vm1339 = vcmp.eq.s32.totalorder %v1303, 1
  %vm1340 = vcmp.eq.s32.totalorder %v1304, 1
  %vm1341 = vcmp.eq.s32.totalorder %v1305, 1
  %vm1342 = vcmp.eq.s32.totalorder %v1306, 1
  %vm1343 = vcmp.eq.s32.totalorder %v1307, 1
  %vm1344 = vcmp.eq.s32.totalorder %v1308, 1
  %vm1345 = vcmp.eq.s32.totalorder %v1309, 1
  %vm1346 = vcmp.eq.s32.totalorder %v1310, 1
  %vm1347 = vcmp.eq.s32.totalorder %v1311, 1
  %vm1348 = vcmp.eq.s32.totalorder %v1312, 1
  %vm1349 = vcmp.eq.s32.totalorder %v1313, 1
  %vm1350 = vcmp.eq.s32.totalorder %v1314, 1
  %vm1351 = vcmp.eq.s32.totalorder %v1315, 1
  %vm1352 = vcmp.eq.s32.totalorder %v1316, 1
  %vm1353 = vcmp.eq.s32.totalorder %v1317, 1
  %vm1354 = vcmp.eq.s32.totalorder %v1318, 1
  %vm1355 = vcmp.eq.s32.totalorder %v1319, 1
  %vm1356 = vcmp.eq.s32.totalorder %v1320, 1
  %vm1357 = vcmp.eq.s32.totalorder %v1321, 1
  %vm1358 = vcmp.eq.s32.totalorder %v1322, 1
  %vm1359 = vcmp.eq.s32.totalorder %v1323, 1
  %vm1360 = vcmp.eq.s32.totalorder %v1324, 1
  %vm1361 = vcmp.eq.s32.totalorder %v1325, 1
  %vm1362 = vcmp.eq.s32.totalorder %v1326, 1
  %vm1363 = vcmp.eq.s32.totalorder %v1327, 1
  %vm1364 = vcmp.eq.s32.totalorder %v1328, 1
  %vm1365 = vcmp.eq.s32.totalorder %v1329, 1
  %vm1366 = vcmp.eq.s32.totalorder %v1330, 1
  %vm1367 = vcmp.eq.s32.totalorder %v1331, 1
  %vm1368 = vcmp.eq.s32.totalorder %v1332, 1
  %vm1369 = vcmp.eq.s32.totalorder %v1333, 1
  %vm1370 = vcmp.eq.s32.totalorder %v1334, 1
  %v1371 = vsel %vm1335, %v1263, 0.0
  %v1372 = vsel %vm1336, %v1264, 0.0
  %v1373 = vsel %vm1337, %v1265, 0.0
  %v1374 = vsel %vm1338, %v1266, 0.0
  %v1375 = vsel %vm1339, %v1267, 0.0
  %v1376 = vsel %vm1340, %v1268, 0.0
  %v1377 = vsel %vm1341, %v1269, 0.0
  %v1378 = vsel %vm1342, %v1270, 0.0
  %v1379 = vsel %vm1343, %v1271, 0.0
  %v1380 = vsel %vm1344, %v1272, 0.0
  %v1381 = vsel %vm1345, %v1273, 0.0
  %v1382 = vsel %vm1346, %v1274, 0.0
  %v1383 = vsel %vm1347, %v1275, 0.0
  %v1384 = vsel %vm1348, %v1276, 0.0
  %v1385 = vsel %vm1349, %v1277, 0.0
  %v1386 = vsel %vm1350, %v1278, 0.0
  %v1387 = vsel %vm1351, %v1279, 0.0
  %v1388 = vsel %vm1352, %v1280, 0.0
  %v1389 = vsel %vm1353, %v1281, 0.0
  %v1390 = vsel %vm1354, %v1282, 0.0
  %v1391 = vsel %vm1355, %v1283, 0.0
  %v1392 = vsel %vm1356, %v1284, 0.0
  %v1393 = vsel %vm1357, %v1285, 0.0
  %v1394 = vsel %vm1358, %v1286, 0.0
  %v1395 = vsel %vm1359, %v1287, 0.0
  %v1396 = vsel %vm1360, %v1288, 0.0
  %v1397 = vsel %vm1361, %v1289, 0.0
  %v1398 = vsel %vm1362, %v1290, 0.0
  %v1399 = vsel %vm1363, %v1291, 0.0
  %v1400 = vsel %vm1364, %v1292, 0.0
  %v1401 = vsel %vm1365, %v1293, 0.0
  %v1402 = vsel %vm1366, %v1294, 0.0
  %v1403 = vsel %vm1367, %v1295, 0.0
  %v1404 = vsel %vm1368, %v1296, 0.0
  %v1405 = vsel %vm1369, %v1297, 0.0
  %v1406 = vsel %vm1370, %v1298, 0.0
  %v1407 = vmul.f32 %v1371, %v1371
  %v1408 = vmul.f32 %v1372, %v1372
  %v1409 = vmul.f32 %v1373, %v1373
  %v1410 = vmul.f32 %v1374, %v1374
  %v1411 = vmul.f32 %v1375, %v1375
  %v1412 = vmul.f32 %v1376, %v1376
  %v1413 = vmul.f32 %v1377, %v1377
  %v1414 = vmul.f32 %v1378, %v1378
  %v1415 = vmul.f32 %v1379, %v1379
  %v1416 = vmul.f32 %v1380, %v1380
  %v1417 = vmul.f32 %v1381, %v1381
  %v1418 = vmul.f32 %v1382, %v1382
  %v1419 = vmul.f32 %v1383, %v1383
  %v1420 = vmul.f32 %v1384, %v1384
  %v1421 = vmul.f32 %v1385, %v1385
  %v1422 = vmul.f32 %v1386, %v1386
  %v1423 = vmul.f32 %v1387, %v1387
  %v1424 = vmul.f32 %v1388, %v1388
  %v1425 = vmul.f32 %v1389, %v1389
  %v1426 = vmul.f32 %v1390, %v1390
  %v1427 = vmul.f32 %v1391, %v1391
  %v1428 = vmul.f32 %v1392, %v1392
  %v1429 = vmul.f32 %v1393, %v1393
  %v1430 = vmul.f32 %v1394, %v1394
  %v1431 = vmul.f32 %v1395, %v1395
  %v1432 = vmul.f32 %v1396, %v1396
  %v1433 = vmul.f32 %v1397, %v1397
  %v1434 = vmul.f32 %v1398, %v1398
  %v1435 = vmul.f32 %v1399, %v1399
  %v1436 = vmul.f32 %v1400, %v1400
  %v1437 = vmul.f32 %v1401, %v1401
  %v1438 = vmul.f32 %v1402, %v1402
  %v1439 = vmul.f32 %v1403, %v1403
  %v1440 = vmul.f32 %v1404, %v1404
  %v1441 = vmul.f32 %v1405, %v1405
  %v1442 = vmul.f32 %v1406, %v1406
  %v1443 = vadd.f32 %v1407, %v1408
  %v1444 = vadd.f32 %v1443, %v1409
  %v1445 = vadd.f32 %v1444, %v1410
  %v1446 = vadd.f32 %v1445, %v1411
  %v1447 = vadd.f32 %v1446, %v1412
  %v1448 = vadd.f32 %v1447, %v1413
  %v1449 = vadd.f32 %v1448, %v1414
  %v1450 = vadd.f32 %v1449, %v1415
  %v1451 = vadd.f32 %v1450, %v1416
  %v1452 = vadd.f32 %v1451, %v1417
  %v1453 = vadd.f32 %v1452, %v1418
  %v1454 = vadd.f32 %v1453, %v1419
  %v1455 = vadd.f32 %v1454, %v1420
  %v1456 = vadd.f32 %v1455, %v1421
  %v1457 = vadd.f32 %v1456, %v1422
  %v1458 = vadd.f32 %v1457, %v1423
  %v1459 = vadd.f32 %v1458, %v1424
  %v1460 = vadd.f32 %v1459, %v1425
  %v1461 = vadd.f32 %v1460, %v1426
  %v1462 = vadd.f32 %v1461, %v1427
  %v1463 = vadd.f32 %v1462, %v1428
  %v1464 = vadd.f32 %v1463, %v1429
  %v1465 = vadd.f32 %v1464, %v1430
  %v1466 = vadd.f32 %v1465, %v1431
  %v1467 = vadd.f32 %v1466, %v1432
  %v1468 = vadd.f32 %v1467, %v1433
  %v1469 = vadd.f32 %v1468, %v1434
  %v1470 = vadd.f32 %v1469, %v1435
  %v1471 = vadd.f32 %v1470, %v1436
  %v1472 = vadd.f32 %v1471, %v1437
  %v1473 = vadd.f32 %v1472, %v1438
  %v1474 = vadd.f32 %v1473, %v1439
  %v1475 = vadd.f32 %v1474, %v1440
  %v1476 = vadd.f32 %v1475, %v1441
  %v1477 = vadd.f32 %v1476, %v1442
  %1478 = vadd.xlane.f32.xlu0 %v1477
  %v1479 = vpop.xlane.xlu0 %1478
  %v1480 = vrot.slane %v1479, 4
  %v1481 = vadd.f32 %v1479, %v1480
  %v1482 = vrot.slane %v1481, 2
  %v1483 = vadd.f32 %v1481, %v1482
  %v1484 = vrot.slane %v1483, 1
  %v1485 = vadd.f32 %v1483, %v1484
  %s1486 = vtos %v1485
  %v1487 = vstv %s1486
  %1488 = vst [vmem:[%s4] sm:$0xff] %v1487
  // Predicated region
  $region14: #{vector_quantizer_forward.1} parent=0 // pred_check
    _
  $region15: #{vector_quantizer_forward.1} parent=0 // pred_check_branch
    %1490 = sbr.rel (0) target = $region17
  $region16: #{vector_quantizer_forward.1} parent=0 // pred_region
    _
  $region17: #{vector_quantizer_forward.1} parent=0 // pred_fallthru
    _
  // Predicated region
  $region18: #{vector_quantizer_forward.1} parent=0 // pred_check
    _
  $region19: #{vector_quantizer_forward.1} parent=0 // pred_check_branch
    %1492 = sbr.rel (0) target = $region21
  $region20: #{vector_quantizer_forward.1} parent=0 // pred_region
    _
  $region21: #{vector_quantizer_forward.1} parent=0 // pred_fallthru
    _
  // Predicated region
  $region22: #{vector_quantizer_forward.1} parent=0 // pred_check
    _
  $region23: #{vector_quantizer_forward.1} parent=0 // pred_check_branch
    %1494 = sbr.rel (0) target = $region25
  $region24: #{vector_quantizer_forward.1} parent=0 // pred_region
    _
  $region25: #{vector_quantizer_forward.1} parent=0 // pred_fallthru
    _
  // Predicated region
  $region26: #{vector_quantizer_forward.1} parent=0 // pred_check
    _
  $region27: #{vector_quantizer_forward.1} parent=0 // pred_check_branch
    %1496 = sbr.rel (0) target = $region29
  $region28: #{vector_quantizer_forward.1} parent=0 // pred_region
    _
  $region29: #{vector_quantizer_forward.1} parent=0 // pred_fallthru
    _

</llo_original>
